<compile_context>
chip_gen: v6e
topology: v6e:2x2x1
jax: 0.10.0
libtpu: 0.0.40
codegen_flags: <defaults>
</compile_context>

<pallas_src>
import jax
import jax.numpy as jnp
from jax.experimental import pallas as pl
from jax.experimental.pallas import tpu as pltpu

BIT_WIDTH = 4
RELU_ACT_SCALE = 6.0 / (2 ** BIT_WIDTH - 1)          # unsigned range [0, 15]
ID_ACT_SCALE = 6.0 / (2 ** (BIT_WIDTH - 1) - 1)      # signed range [-8, 7]
LANE = 128


def _round_up(x, m):
    return (x + m - 1) // m * m


def _row_tile(Ho, Wo, max_rows=1024):
    """Largest divisor of Ho with TH*Wo <= max_rows, preferring >= 2 row tiles."""
    divs = [d for d in range(1, Ho + 1) if Ho % d == 0 and d * Wo <= max_rows]
    if not divs:
        return 1
    sub = [d for d in divs if d < Ho] or divs
    return max(sub)


# ---------------------------------------------------------------------------
# Pallas kernels
# ---------------------------------------------------------------------------
def _make_conv1_kernel(TH, Wo, Kpad, Cpad, act_scale, qmax_u):
    """im2col matmul + fused QuantReLU.  One MXU contraction per row tile."""

    def kernel(cols_ref, w_ref, o_ref):
        x = cols_ref[0].reshape(TH * Wo, Kpad)                 # bf16, lane-dense
        y = jnp.dot(x, w_ref[...], preferred_element_type=jnp.float32)
        y = jnp.maximum(y, 0.0)                                # QuantReLU (fixed scale)
        y = jnp.clip(jnp.round(y / act_scale), 0.0, qmax_u) * act_scale
        o_ref[0] = y.reshape(TH, Wo, Cpad).astype(o_ref.dtype)  # lane-dense store

    return kernel


def _make_conv2_residual_kernel(TH, Wo, Cpad, Csc, fuse_sc_conv,
                                id_scale, relu_scale, bit_width):
    """3x3 stride-1 conv (9 per-tap K=Cpad dots) + fused shortcut + quant + relu2."""
    qmax_s = float(2 ** (bit_width - 1) - 1)
    qmin_s = float(-(2 ** (bit_width - 1)))
    qmax_u = float(2 ** bit_width - 1)

    def body(out1p_ref, w2_ref, sc_ref, wsc_ref, o_ref):
        r = pl.program_id(1)
        row0 = r * TH
        acc = jnp.zeros((TH * Wo, Cpad), jnp.float32)
        for kh in range(3):                                    # static unroll, single
            for kw in range(3):                                # f32 accumulator
                patch = out1p_ref[0, pl.ds(row0 + kh, TH), pl.ds(kw, Wo), :]
                acc = acc + jnp.dot(patch.reshape(TH * Wo, Cpad),
                                    w2_ref[kh * 3 + kw],
                                    preferred_element_type=jnp.float32)
        if fuse_sc_conv:                                       # 1x1 quant shortcut conv
            sc = jnp.dot(sc_ref[0].reshape(TH * Wo, Csc),
                         wsc_ref[...], preferred_element_type=jnp.float32)
        else:                                                  # identity shortcut
            sc = sc_ref[0].reshape(TH * Wo, Cpad).astype(jnp.float32)
        # quant_inp(out) + quant_inp(shortcut) -> relu2 (QuantReLU), all lane-dense
        a = jnp.clip(jnp.round(acc / id_scale), qmin_s, qmax_s) * id_scale
        b = jnp.clip(jnp.round(sc / id_scale), qmin_s, qmax_s) * id_scale
        y = jnp.maximum(a + b, 0.0)
        y = jnp.clip(jnp.round(y / relu_scale), 0.0, qmax_u) * relu_scale
        o_ref[0] = y.reshape(TH, Wo, Cpad)

    if fuse_sc_conv:
        def kernel(out1p_ref, w2_ref, sc_ref, wsc_ref, o_ref):
            body(out1p_ref, w2_ref, sc_ref, wsc_ref, o_ref)
    else:
        def kernel(out1p_ref, w2_ref, sc_ref, o_ref):
            body(out1p_ref, w2_ref, sc_ref, None, o_ref)
    return kernel


# ---------------------------------------------------------------------------
# pallas_call wrappers
# ---------------------------------------------------------------------------
def conv1_im2col_relu_quant(cols, w_packed, *, TH, act_scale, bit_width):
    N, Ho, Wo, Kpad = cols.shape
    _, Cpad = w_packed.shape
    R = Ho // TH
    qmax_u = float(2 ** bit_width - 1)
    kernel = _make_conv1_kernel(TH, Wo, Kpad, Cpad, act_scale, qmax_u)
    return pl.pallas_call(
        kernel,
        out_shape=jax.ShapeDtypeStruct((N, Ho, Wo, Cpad), jnp.bfloat16),
        grid=(N, R),
        in_specs=[
            pl.BlockSpec((1, TH, Wo, Kpad), lambda n, r: (n, r, 0, 0)),
            pl.BlockSpec((Kpad, Cpad), lambda n, r: (0, 0)),
        ],
        out_specs=pl.BlockSpec((1, TH, Wo, Cpad), lambda n, r: (n, r, 0, 0)),
        compiler_params=pltpu.CompilerParams(
            dimension_semantics=("parallel", "parallel")),
    )(cols, w_packed)


def conv2_residual_fused(out1p, w2_packed, sc, wsc_packed, *, TH,
                         id_scale, relu_scale, bit_width):
    N, Hp2, Wp2, Cpad = out1p.shape
    Ho, Wo = Hp2 - 2, Wp2 - 2
    R = Ho // TH
    fuse = wsc_packed is not None
    Csc = sc.shape[-1]
    kernel = _make_conv2_residual_kernel(TH, Wo, Cpad, Csc, fuse,
                                         id_scale, relu_scale, bit_width)
    in_specs = [
        # full padded image per batch item; revisited (no re-DMA) across row tiles.
        pl.BlockSpec((1, Hp2, Wp2, Cpad), lambda n, r: (n, 0, 0, 0)),
        pl.BlockSpec(w2_packed.shape, lambda n, r: (0, 0, 0)),
        pl.BlockSpec((1, TH, Wo, Csc), lambda n, r: (n, r, 0, 0)),
    ]
    args = [out1p, w2_packed, sc]
    if fuse:
        in_specs.append(pl.BlockSpec(wsc_packed.shape, lambda n, r: (0, 0)))
        args.append(wsc_packed)
    return pl.pallas_call(
        kernel,
        out_shape=jax.ShapeDtypeStruct((N, Ho, Wo, Cpad), jnp.float32),
        grid=(N, R),
        in_specs=in_specs,
        out_specs=pl.BlockSpec((1, TH, Wo, Cpad), lambda n, r: (n, r, 0, 0)),
        compiler_params=pltpu.CompilerParams(
            dimension_semantics=("parallel", "parallel")),
    )(*args)


# ---------------------------------------------------------------------------
# weight preprocessing (glue, off the hot path)
# ---------------------------------------------------------------------------
def fake_quant_weight(w, bit_width=BIT_WIDTH):
    qmax = float(2 ** (bit_width - 1) - 1)
    scale = jnp.maximum(jnp.max(jnp.abs(w)) / qmax, 1e-8)
    return jnp.clip(jnp.round(w / scale), -qmax, qmax) * scale


def _pack_w_im2col(w_hwio, kpad, cpad):
    KH, KW, Cin, Cout = w_hwio.shape
    wflat = w_hwio.reshape(KH * KW * Cin, Cout)
    wp = jnp.zeros((kpad, cpad), w_hwio.dtype).at[:KH * KW * Cin, :Cout].set(wflat)
    return wp.astype(jnp.bfloat16)


def _pack_w_taps(w_hwio, cpad):
    KH, KW, Cin, Cout = w_hwio.shape
    wp = jnp.zeros((KH, KW, cpad, cpad), w_hwio.dtype)
    wp = wp.at[:, :, :Cin, :Cout].set(w_hwio)
    return wp.reshape(KH * KW, cpad, cpad).astype(jnp.bfloat16)


def _pack_w_1x1(w_hwio, cin_pad, cpad):
    _, _, Cin, Cout = w_hwio.shape
    wp = jnp.zeros((cin_pad, cpad), w_hwio.dtype).at[:Cin, :Cout].set(w_hwio[0, 0])
    return wp.astype(jnp.bfloat16)


# ---------------------------------------------------------------------------
# Module: BasicBlock_qnn
# ---------------------------------------------------------------------------
class BasicBlockQnnPallas:
    expansion = 1

    def __init__(self, in_planes, planes, stride=1, bit_width=BIT_WIDTH, key=None):
        if key is None:
            key = jax.random.PRNGKey(0)
        if stride == 1:
            # identity shortcut only valid when channel counts match
            assert in_planes == planes * self.expansion, (
                "stride==1 identity shortcut requires in_planes == planes")
        k1, k2, k3 = jax.random.split(key, 3)
        self.stride = stride
        self.bit_width = bit_width
        self.in_planes = in_planes
        self.planes = planes
        self.cpad = _round_up(max(planes, 1), LANE)
        self.kpad = _round_up(9 * in_planes, LANE)
        self.csc_pad = _round_up(in_planes, LANE)

        self.w1 = fake_quant_weight(
            0.1 * jax.random.normal(k1, (3, 3, in_planes, planes), jnp.float32),
            bit_width)
        self.w2 = fake_quant_weight(
            0.1 * jax.random.normal(k2, (3, 3, planes, planes), jnp.float32),
            bit_width)
        # pre-packed, lane-padded, bf16 matmul operands (done once, off hot path)
        self.w1_packed = _pack_w_im2col(self.w1, self.kpad, self.cpad)  # (Kpad, Cpad)
        self.w2_packed = _pack_w_taps(self.w2, self.cpad)               # (9, Cpad, Cpad)
        if stride != 1:
            self.wsc = fake_quant_weight(
                0.1 * jax.random.normal(k3, (1, 1, in_planes, planes), jnp.float32),
                bit_width)
            self.wsc_packed = _pack_w_1x1(self.wsc, self.csc_pad, self.cpad)
        else:
            self.wsc = None
            self.wsc_packed = None

    def __call__(self, x_nchw):
        x = jnp.transpose(x_nchw, (0, 2, 3, 1)).astype(jnp.float32)   # NHWC
        N, H, W, Cin = x.shape
        s = self.stride
        Ho = (H + 2 - 3) // s + 1
        Wo = (W + 2 - 3) // s + 1
        TH = _row_tile(Ho, Wo)
        Cpad = self.cpad

        # -------- wrapper-side layout plumbing (single pad of x) --------
        xp = jnp.pad(x, ((0, 0), (1, 1), (1, 1), (0, 0)))
        # im2col for conv1: stride handled in the gather, taps ordered (kh, kw, cin)
        # TODO(synk): for large Cin the 9x column blow-up should be replaced by the
        #             per-tap direct-conv path used in the conv2 kernel.
        cols = jnp.concatenate(
            [xp[:, kh:kh + s * (Ho - 1) + 1:s, kw:kw + s * (Wo - 1) + 1:s, :]
             for kh in range(3) for kw in range(3)],
            axis=-1)                                            # (N, Ho, Wo, 9*Cin)
        Kdim = 9 * Cin
        cols = jnp.pad(cols, ((0, 0), (0, 0), (0, 0), (0, self.kpad - Kdim))
                       ).astype(jnp.bfloat16)                   # lane-dense K

        # conv1 + relu1 (fused quantized ReLU), bf16 lane-padded activations
        out1 = conv1_im2col_relu_quant(cols, self.w1_packed, TH=TH,
                                       act_scale=RELU_ACT_SCALE,
                                       bit_width=self.bit_width)
        # halo for conv2
        # TODO(synk): fold this halo into the conv2 kernel (edge-masked taps)
        #             instead of a separate jnp.pad pass.
        out1p = jnp.pad(out1, ((0, 0), (1, 1), (1, 1), (0, 0)))

        # shortcut input for the fused conv2 kernel
        if s != 1:
            sc = x[:, ::s, ::s, :]                              # (N, Ho, Wo, Cin)
            sc = jnp.pad(sc, ((0, 0), (0, 0), (0, 0), (0, self.csc_pad - Cin))
                         ).astype(jnp.bfloat16)                 # lane-dense K
            wsc = self.wsc_packed                               # 1x1 conv fused in-kernel
        else:
            sc = jnp.pad(x, ((0, 0), (0, 0), (0, 0), (0, Cpad - Cin)))  # identity, f32
            wsc = None

        # conv2 + quant_inp(out) + quant_inp(shortcut) + relu2: ONE pallas_call
        out = conv2_residual_fused(out1p, self.w2_packed, sc, wsc, TH=TH,
                                   id_scale=ID_ACT_SCALE,
                                   relu_scale=RELU_ACT_SCALE,
                                   bit_width=self.bit_width)

        out = out[..., :self.planes]                            # drop lane padding
        return jnp.transpose(out, (0, 3, 1, 2))                 # back to NCHW


# ---------------------------------------------------------------------------
# pure-JAX reference (mirrors the kernel's bf16 operand / f32 accum behavior)
# ---------------------------------------------------------------------------
def _ref_forward(x_nhwc, w1, w2, wsc, stride, bit_width):
    qmax_u = float(2 ** bit_width - 1)
    qmax_s = float(2 ** (bit_width - 1) - 1)
    qmin_s = float(-(2 ** (bit_width - 1)))

    def conv(x, w, s, pad):
        return jax.lax.conv_general_dilated(
            x.astype(jnp.bfloat16), w.astype(jnp.bfloat16),
            window_strides=(s, s), padding=((pad, pad), (pad, pad)),
            dimension_numbers=("NHWC", "HWIO", "NHWC"),
            preferred_element_type=jnp.float32)

    out = conv(x_nhwc, w1, stride, 1)
    out = jnp.clip(jnp.round(jnp.maximum(out, 0.0) / RELU_ACT_SCALE),
                   0.0, qmax_u) * RELU_ACT_SCALE
    out = out.astype(jnp.bfloat16).astype(jnp.float32)          # bf16 activation store
    out = conv(out, w2, 1, 1)
    if wsc is not None:
        sc = conv(x_nhwc, wsc, stride, 0)
    else:
        sc = x_nhwc
    a = jnp.clip(jnp.round(out / ID_ACT_SCALE), qmin_s, qmax_s) * ID_ACT_SCALE
    b = jnp.clip(jnp.round(sc / ID_ACT_SCALE), qmin_s, qmax_s) * ID_ACT_SCALE
    y = jnp.maximum(a + b, 0.0)
    return jnp.clip(jnp.round(y / RELU_ACT_SCALE), 0.0, qmax_u) * RELU_ACT_SCALE


# ---------------------------------------------------------------------------
if __name__ == "__main__":
    key = jax.random.PRNGKey(0)
    kx, kp = jax.random.split(key)

    # stride != 1 exercises the fused 1x1 quantized shortcut conv.
    N, C_IN, H, W = 2, 4, 16, 16
    PLANES, STRIDE = 8, 2

    x = jax.random.normal(kx, (N, C_IN, H, W), jnp.float32)     # NCHW like PyTorch
    block = BasicBlockQnnPallas(C_IN, PLANES, stride=STRIDE,
                                bit_width=BIT_WIDTH, key=kp)
    y = jax.block_until_ready(jax.jit(block.__call__)(x))

    expected_shape = (N, PLANES, H // STRIDE, W // STRIDE)
    assert y.shape == expected_shape, (y.shape, expected_shape)
    assert bool(jnp.all(jnp.isfinite(y)))
    assert bool(jnp.all(y >= 0.0))                              # quantized ReLU output

    y_ref = jnp.transpose(
        _ref_forward(jnp.transpose(x, (0, 2, 3, 1)), block.w1, block.w2,
                     block.wsc, STRIDE, BIT_WIDTH), (0, 3, 1, 2))
    frac_bad = float(jnp.mean((jnp.abs(y - y_ref) > 1e-2).astype(jnp.float32)))
    assert frac_bad < 0.01, ("conv-path mismatch fraction", frac_bad)

    # stride == 1 exercises the identity-shortcut path (in_planes == planes).
    block1 = BasicBlockQnnPallas(PLANES, PLANES, stride=1,
                                 bit_width=BIT_WIDTH, key=kp)
    x1 = jax.random.normal(kx, (N, PLANES, H, W), jnp.float32)
    y1 = jax.block_until_ready(jax.jit(block1.__call__)(x1))
    assert y1.shape == (N, PLANES, H, W)
    assert bool(jnp.all(jnp.isfinite(y1))) and bool(jnp.all(y1 >= 0.0))

    y1_ref = jnp.transpose(
        _ref_forward(jnp.transpose(x1, (0, 2, 3, 1)), block1.w1, block1.w2,
                     None, 1, BIT_WIDTH), (0, 3, 1, 2))
    frac_bad1 = float(jnp.mean((jnp.abs(y1 - y1_ref) > 1e-2).astype(jnp.float32)))
    assert frac_bad1 < 0.01, ("identity-path mismatch fraction", frac_bad1)

    print("KERNEL_OK")
</pallas_src>

<mosaic_0001>
module attributes {stable_mosaic.version = 11 : i64} {
  func.func @kernel(%arg0: i32, %arg1: i32, %arg2: memref<1x4x8x128xbf16, #tpu.memory_space<vmem>>, %arg3: memref<128x128xbf16, #tpu.memory_space<vmem>>, %arg4: memref<1x4x8x128xbf16, #tpu.memory_space<vmem>>) attributes {dimension_semantics = [#tpu.dimension_semantics<parallel>, #tpu.dimension_semantics<parallel>], iteration_bounds = array<i64: 2, 2>, scalar_prefetch = 0 : i64, scratch_operands = 0 : i64, tpu.core_type = #tpu.core_type<tc>, window_params = [{transform_indices = @transform_0, window_bounds = array<i64: 1, 4, 8, 128>}, {pipeline_mode = #tpu.pipeline_mode<synchronous>, transform_indices = @transform_1, window_bounds = array<i64: 128, 128>}, {transform_indices = @transform_2, window_bounds = array<i64: 1, 4, 8, 128>}]} {
    %c0 = arith.constant 0 : index
    %c0_0 = arith.constant 0 : index
    %c0_1 = arith.constant 0 : index
    %c0_2 = arith.constant 0 : index
    %0 = vector.load %arg2[%c0, %c0_0, %c0_1, %c0_2] : memref<1x4x8x128xbf16, #tpu.memory_space<vmem>>, vector<1x4x8x128xbf16>
    %1 = vector.shape_cast %0 : vector<1x4x8x128xbf16> to vector<4x8x128xbf16>
    %2 = vector.shape_cast %1 : vector<4x8x128xbf16> to vector<32x128xbf16>
    %c0_3 = arith.constant 0 : index
    %c0_4 = arith.constant 0 : index
    %3 = vector.load %arg3[%c0_3, %c0_4] : memref<128x128xbf16, #tpu.memory_space<vmem>>, vector<128x128xbf16>
    %cst = arith.constant dense<0.000000e+00> : vector<32x128xf32>
    %4 = tpu.matmul %2, %3, %cst {dimension_numbers = #tpu.dot_dimension_numbers<[1], [0], [0], [1], [0, 0, 1, 1], [], []>} : vector<32x128xbf16>, vector<128x128xbf16>, vector<32x128xf32> -> vector<32x128xf32>
    %cst_5 = arith.constant 0.000000e+00 : f32
    %5 = vector.broadcast %cst_5 : f32 to vector<32x128xf32>
    %6 = arith.maximumf %4, %5 : vector<32x128xf32>
    %cst_6 = arith.constant 4.000000e-01 : f32
    %7 = vector.broadcast %cst_6 : f32 to vector<32x128xf32>
    %8 = arith.divf %6, %7 : vector<32x128xf32>
    %9 = math.roundeven %8 : vector<32x128xf32>
    %cst_7 = arith.constant 0.000000e+00 : f32
    %cst_8 = arith.constant 1.500000e+01 : f32
    %10 = vector.broadcast %cst_7 : f32 to vector<32x128xf32>
    %11 = arith.maximumf %10, %9 : vector<32x128xf32>
    %12 = vector.broadcast %cst_8 : f32 to vector<32x128xf32>
    %13 = arith.minimumf %12, %11 : vector<32x128xf32>
    %cst_9 = arith.constant 4.000000e-01 : f32
    %14 = vector.broadcast %cst_9 : f32 to vector<32x128xf32>
    %15 = arith.mulf %13, %14 : vector<32x128xf32>
    %16 = vector.shape_cast %15 : vector<32x128xf32> to vector<4x8x128xf32>
    %17 = arith.truncf %16 : vector<4x8x128xf32> to vector<4x8x128xbf16>
    %c0_10 = arith.constant 0 : index
    %c0_11 = arith.constant 0 : index
    %c0_12 = arith.constant 0 : index
    %c0_13 = arith.constant 0 : index
    %18 = vector.load %arg4[%c0_10, %c0_11, %c0_12, %c0_13] : memref<1x4x8x128xbf16, #tpu.memory_space<vmem>>, vector<1x4x8x128xbf16>
    %19 = vector.shape_cast %18 : vector<1x4x8x128xbf16> to vector<4x8x128xbf16>
    %20 = vector.shape_cast %17 : vector<4x8x128xbf16> to vector<1x4x8x128xbf16>
    tpu.vector_store %arg4[%c0_10, %c0_11, %c0_12, %c0_13], %20 {strides = array<i32>} : memref<1x4x8x128xbf16, #tpu.memory_space<vmem>>, vector<1x4x8x128xbf16>,
    return
  }
  func.func @transform_0(%arg0: i32, %arg1: i32) -> (i32, i32, i32, i32) {
    %c0_i32 = arith.constant 0 : i32
    %c0_i32_0 = arith.constant 0 : i32
    %c0_i32_1 = arith.constant 0 : i32
    return %arg0, %arg1, %c0_i32, %c0_i32_0 : i32, i32, i32, i32
  }
  func.func @transform_1(%arg0: i32, %arg1: i32) -> (i32, i32) {
    %c0_i32 = arith.constant 0 : i32
    %c0_i32_0 = arith.constant 0 : i32
    %c0_i32_1 = arith.constant 0 : i32
    return %c0_i32, %c0_i32_0 : i32, i32
  }
  func.func @transform_2(%arg0: i32, %arg1: i32) -> (i32, i32, i32, i32) {
    %c0_i32 = arith.constant 0 : i32
    %c0_i32_0 = arith.constant 0 : i32
    %c0_i32_1 = arith.constant 0 : i32
    return %arg0, %arg1, %c0_i32, %c0_i32_0 : i32, i32, i32, i32
  }
}

module attributes {stable_mosaic.version = 11 : i64} {
  func.func @kernel(%arg0: i32, %arg1: i32, %arg2: memref<1x10x10x128xbf16, #tpu.memory_space<vmem>>, %arg3: memref<9x128x128xbf16, #tpu.memory_space<vmem>>, %arg4: memref<1x4x8x128xbf16, #tpu.memory_space<vmem>>, %arg5: memref<128x128xbf16, #tpu.memory_space<vmem>>, %arg6: memref<1x4x8x128xf32, #tpu.memory_space<vmem>>) attributes {dimension_semantics = [#tpu.dimension_semantics<parallel>, #tpu.dimension_semantics<parallel>], iteration_bounds = array<i64: 2, 2>, scalar_prefetch = 0 : i64, scratch_operands = 0 : i64, tpu.core_type = #tpu.core_type<tc>, window_params = [{transform_indices = @transform_0, window_bounds = array<i64: 1, 10, 10, 128>}, {pipeline_mode = #tpu.pipeline_mode<synchronous>, transform_indices = @transform_1, window_bounds = array<i64: 9, 128, 128>}, {transform_indices = @transform_2, window_bounds = array<i64: 1, 4, 8, 128>}, {pipeline_mode = #tpu.pipeline_mode<synchronous>, transform_indices = @transform_3, window_bounds = array<i64: 128, 128>}, {transform_indices = @transform_4, window_bounds = array<i64: 1, 4, 8, 128>}]} {
    %c4_i32 = arith.constant 4 : i32
    %0 = arith.muli %arg1, %c4_i32 : i32
    %cst = arith.constant 0.000000e+00 : f32
    %1 = vector.broadcast %cst : f32 to vector<32x128xf32>
    %c0_i32 = arith.constant 0 : i32
    %2 = arith.addi %0, %c0_i32 : i32
    %c0 = arith.constant 0 : index
    %3 = arith.index_cast %2 : i32 to index
    %c0_0 = arith.constant 0 : index
    %c0_1 = arith.constant 0 : index
    %4 = vector.load %arg2[%c0, %3, %c0_0, %c0_1] : memref<1x10x10x128xbf16, #tpu.memory_space<vmem>>, vector<1x4x8x128xbf16>
    %5 = vector.shape_cast %4 : vector<1x4x8x128xbf16> to vector<4x8x128xbf16>
    %6 = vector.shape_cast %5 : vector<4x8x128xbf16> to vector<32x128xbf16>
    %c0_2 = arith.constant 0 : index
    %c0_3 = arith.constant 0 : index
    %c0_4 = arith.constant 0 : index
    %7 = vector.load %arg3[%c0_2, %c0_3, %c0_4] : memref<9x128x128xbf16, #tpu.memory_space<vmem>>, vector<1x128x128xbf16>
    %8 = vector.shape_cast %7 : vector<1x128x128xbf16> to vector<128x128xbf16>
    %cst_5 = arith.constant dense<0.000000e+00> : vector<32x128xf32>
    %9 = tpu.matmul %6, %8, %cst_5 {dimension_numbers = #tpu.dot_dimension_numbers<[1], [0], [0], [1], [0, 0, 1, 1], [], []>} : vector<32x128xbf16>, vector<128x128xbf16>, vector<32x128xf32> -> vector<32x128xf32>
    %10 = arith.addf %1, %9 : vector<32x128xf32>
    %c0_i32_6 = arith.constant 0 : i32
    %11 = arith.addi %0, %c0_i32_6 : i32
    %c0_7 = arith.constant 0 : index
    %12 = arith.index_cast %11 : i32 to index
    %c1 = arith.constant 1 : index
    %c0_8 = arith.constant 0 : index
    %13 = vector.load %arg2[%c0_7, %12, %c1, %c0_8] : memref<1x10x10x128xbf16, #tpu.memory_space<vmem>>, vector<1x4x8x128xbf16>
    %14 = vector.shape_cast %13 : vector<1x4x8x128xbf16> to vector<4x8x128xbf16>
    %15 = vector.shape_cast %14 : vector<4x8x128xbf16> to vector<32x128xbf16>
    %c1_9 = arith.constant 1 : index
    %c0_10 = arith.constant 0 : index
    %c0_11 = arith.constant 0 : index
    %16 = vector.load %arg3[%c1_9, %c0_10, %c0_11] : memref<9x128x128xbf16, #tpu.memory_space<vmem>>, vector<1x128x128xbf16>
    %17 = vector.shape_cast %16 : vector<1x128x128xbf16> to vector<128x128xbf16>
    %cst_12 = arith.constant dense<0.000000e+00> : vector<32x128xf32>
    %18 = tpu.matmul %15, %17, %cst_12 {dimension_numbers = #tpu.dot_dimension_numbers<[1], [0], [0], [1], [0, 0, 1, 1], [], []>} : vector<32x128xbf16>, vector<128x128xbf16>, vector<32x128xf32> -> vector<32x128xf32>
    %19 = arith.addf %10, %18 : vector<32x128xf32>
    %c0_i32_13 = arith.constant 0 : i32
    %20 = arith.addi %0, %c0_i32_13 : i32
    %c0_14 = arith.constant 0 : index
    %21 = arith.index_cast %20 : i32 to index
    %c2 = arith.constant 2 : index
    %c0_15 = arith.constant 0 : index
    %22 = vector.load %arg2[%c0_14, %21, %c2, %c0_15] : memref<1x10x10x128xbf16, #tpu.memory_space<vmem>>, vector<1x4x8x128xbf16>
    %23 = vector.shape_cast %22 : vector<1x4x8x128xbf16> to vector<4x8x128xbf16>
    %24 = vector.shape_cast %23 : vector<4x8x128xbf16> to vector<32x128xbf16>
    %c2_16 = arith.constant 2 : index
    %c0_17 = arith.constant 0 : index
    %c0_18 = arith.constant 0 : index
    %25 = vector.load %arg3[%c2_16, %c0_17, %c0_18] : memref<9x128x128xbf16, #tpu.memory_space<vmem>>, vector<1x128x128xbf16>
    %26 = vector.shape_cast %25 : vector<1x128x128xbf16> to vector<128x128xbf16>
    %cst_19 = arith.constant dense<0.000000e+00> : vector<32x128xf32>
    %27 = tpu.matmul %24, %26, %cst_19 {dimension_numbers = #tpu.dot_dimension_numbers<[1], [0], [0], [1], [0, 0, 1, 1], [], []>} : vector<32x128xbf16>, vector<128x128xbf16>, vector<32x128xf32> -> vector<32x128xf32>
    %28 = arith.addf %19, %27 : vector<32x128xf32>
    %c1_i32 = arith.constant 1 : i32
    %29 = arith.addi %0, %c1_i32 : i32
    %c0_20 = arith.constant 0 : index
    %30 = arith.index_cast %29 : i32 to index
    %c0_21 = arith.constant 0 : index
    %c0_22 = arith.constant 0 : index
    %31 = vector.load %arg2[%c0_20, %30, %c0_21, %c0_22] : memref<1x10x10x128xbf16, #tpu.memory_space<vmem>>, vector<1x4x8x128xbf16>
    %32 = vector.shape_cast %31 : vector<1x4x8x128xbf16> to vector<4x8x128xbf16>
    %33 = vector.shape_cast %32 : vector<4x8x128xbf16> to vector<32x128xbf16>
    %c3 = arith.constant 3 : index
    %c0_23 = arith.constant 0 : index
    %c0_24 = arith.constant 0 : index
    %34 = vector.load %arg3[%c3, %c0_23, %c0_24] : memref<9x128x128xbf16, #tpu.memory_space<vmem>>, vector<1x128x128xbf16>
    %35 = vector.shape_cast %34 : vector<1x128x128xbf16> to vector<128x128xbf16>
    %cst_25 = arith.constant dense<0.000000e+00> : vector<32x128xf32>
    %36 = tpu.matmul %33, %35, %cst_25 {dimension_numbers = #tpu.dot_dimension_numbers<[1], [0], [0], [1], [0, 0, 1, 1], [], []>} : vector<32x128xbf16>, vector<128x128xbf16>, vector<32x128xf32> -> vector<32x128xf32>
    %37 = arith.addf %28, %36 : vector<32x128xf32>
    %c1_i32_26 = arith.constant 1 : i32
    %38 = arith.addi %0, %c1_i32_26 : i32
    %c0_27 = arith.constant 0 : index
    %39 = arith.index_cast %38 : i32 to index
    %c1_28 = arith.constant 1 : index
    %c0_29 = arith.constant 0 : index
    %40 = vector.load %arg2[%c0_27, %39, %c1_28, %c0_29] : memref<1x10x10x128xbf16, #tpu.memory_space<vmem>>, vector<1x4x8x128xbf16>
    %41 = vector.shape_cast %40 : vector<1x4x8x128xbf16> to vector<4x8x128xbf16>
    %42 = vector.shape_cast %41 : vector<4x8x128xbf16> to vector<32x128xbf16>
    %c4 = arith.constant 4 : index
    %c0_30 = arith.constant 0 : index
    %c0_31 = arith.constant 0 : index
    %43 = vector.load %arg3[%c4, %c0_30, %c0_31] : memref<9x128x128xbf16, #tpu.memory_space<vmem>>, vector<1x128x128xbf16>
    %44 = vector.shape_cast %43 : vector<1x128x128xbf16> to vector<128x128xbf16>
    %cst_32 = arith.constant dense<0.000000e+00> : vector<32x128xf32>
    %45 = tpu.matmul %42, %44, %cst_32 {dimension_numbers = #tpu.dot_dimension_numbers<[1], [0], [0], [1], [0, 0, 1, 1], [], []>} : vector<32x128xbf16>, vector<128x128xbf16>, vector<32x128xf32> -> vector<32x128xf32>
    %46 = arith.addf %37, %45 : vector<32x128xf32>
    %c1_i32_33 = arith.constant 1 : i32
    %47 = arith.addi %0, %c1_i32_33 : i32
    %c0_34 = arith.constant 0 : index
    %48 = arith.index_cast %47 : i32 to index
    %c2_35 = arith.constant 2 : index
    %c0_36 = arith.constant 0 : index
    %49 = vector.load %arg2[%c0_34, %48, %c2_35, %c0_36] : memref<1x10x10x128xbf16, #tpu.memory_space<vmem>>, vector<1x4x8x128xbf16>
    %50 = vector.shape_cast %49 : vector<1x4x8x128xbf16> to vector<4x8x128xbf16>
    %51 = vector.shape_cast %50 : vector<4x8x128xbf16> to vector<32x128xbf16>
    %c5 = arith.constant 5 : index
    %c0_37 = arith.constant 0 : index
    %c0_38 = arith.constant 0 : index
    %52 = vector.load %arg3[%c5, %c0_37, %c0_38] : memref<9x128x128xbf16, #tpu.memory_space<vmem>>, vector<1x128x128xbf16>
    %53 = vector.shape_cast %52 : vector<1x128x128xbf16> to vector<128x128xbf16>
    %cst_39 = arith.constant dense<0.000000e+00> : vector<32x128xf32>
    %54 = tpu.matmul %51, %53, %cst_39 {dimension_numbers = #tpu.dot_dimension_numbers<[1], [0], [0], [1], [0, 0, 1, 1], [], []>} : vector<32x128xbf16>, vector<128x128xbf16>, vector<32x128xf32> -> vector<32x128xf32>
    %55 = arith.addf %46, %54 : vector<32x128xf32>
    %c2_i32 = arith.constant 2 : i32
    %56 = arith.addi %0, %c2_i32 : i32
    %c0_40 = arith.constant 0 : index
    %57 = arith.index_cast %56 : i32 to index
    %c0_41 = arith.constant 0 : index
    %c0_42 = arith.constant 0 : index
    %58 = vector.load %arg2[%c0_40, %57, %c0_41, %c0_42] : memref<1x10x10x128xbf16, #tpu.memory_space<vmem>>, vector<1x4x8x128xbf16>
    %59 = vector.shape_cast %58 : vector<1x4x8x128xbf16> to vector<4x8x128xbf16>
    %60 = vector.shape_cast %59 : vector<4x8x128xbf16> to vector<32x128xbf16>
    %c6 = arith.constant 6 : index
    %c0_43 = arith.constant 0 : index
    %c0_44 = arith.constant 0 : index
    %61 = vector.load %arg3[%c6, %c0_43, %c0_44] : memref<9x128x128xbf16, #tpu.memory_space<vmem>>, vector<1x128x128xbf16>
    %62 = vector.shape_cast %61 : vector<1x128x128xbf16> to vector<128x128xbf16>
    %cst_45 = arith.constant dense<0.000000e+00> : vector<32x128xf32>
    %63 = tpu.matmul %60, %62, %cst_45 {dimension_numbers = #tpu.dot_dimension_numbers<[1], [0], [0], [1], [0, 0, 1, 1], [], []>} : vector<32x128xbf16>, vector<128x128xbf16>, vector<32x128xf32> -> vector<32x128xf32>
    %64 = arith.addf %55, %63 : vector<32x128xf32>
    %c2_i32_46 = arith.constant 2 : i32
    %65 = arith.addi %0, %c2_i32_46 : i32
    %c0_47 = arith.constant 0 : index
    %66 = arith.index_cast %65 : i32 to index
    %c1_48 = arith.constant 1 : index
    %c0_49 = arith.constant 0 : index
    %67 = vector.load %arg2[%c0_47, %66, %c1_48, %c0_49] : memref<1x10x10x128xbf16, #tpu.memory_space<vmem>>, vector<1x4x8x128xbf16>
    %68 = vector.shape_cast %67 : vector<1x4x8x128xbf16> to vector<4x8x128xbf16>
    %69 = vector.shape_cast %68 : vector<4x8x128xbf16> to vector<32x128xbf16>
    %c7 = arith.constant 7 : index
    %c0_50 = arith.constant 0 : index
    %c0_51 = arith.constant 0 : index
    %70 = vector.load %arg3[%c7, %c0_50, %c0_51] : memref<9x128x128xbf16, #tpu.memory_space<vmem>>, vector<1x128x128xbf16>
    %71 = vector.shape_cast %70 : vector<1x128x128xbf16> to vector<128x128xbf16>
    %cst_52 = arith.constant dense<0.000000e+00> : vector<32x128xf32>
    %72 = tpu.matmul %69, %71, %cst_52 {dimension_numbers = #tpu.dot_dimension_numbers<[1], [0], [0], [1], [0, 0, 1, 1], [], []>} : vector<32x128xbf16>, vector<128x128xbf16>, vector<32x128xf32> -> vector<32x128xf32>
    %73 = arith.addf %64, %72 : vector<32x128xf32>
    %c2_i32_53 = arith.constant 2 : i32
    %74 = arith.addi %0, %c2_i32_53 : i32
    %c0_54 = arith.constant 0 : index
    %75 = arith.index_cast %74 : i32 to index
    %c2_55 = arith.constant 2 : index
    %c0_56 = arith.constant 0 : index
    %76 = vector.load %arg2[%c0_54, %75, %c2_55, %c0_56] : memref<1x10x10x128xbf16, #tpu.memory_space<vmem>>, vector<1x4x8x128xbf16>
    %77 = vector.shape_cast %76 : vector<1x4x8x128xbf16> to vector<4x8x128xbf16>
    %78 = vector.shape_cast %77 : vector<4x8x128xbf16> to vector<32x128xbf16>
    %c8 = arith.constant 8 : index
    %c0_57 = arith.constant 0 : index
    %c0_58 = arith.constant 0 : index
    %79 = vector.load %arg3[%c8, %c0_57, %c0_58] : memref<9x128x128xbf16, #tpu.memory_space<vmem>>, vector<1x128x128xbf16>
    %80 = vector.shape_cast %79 : vector<1x128x128xbf16> to vector<128x128xbf16>
    %cst_59 = arith.constant dense<0.000000e+00> : vector<32x128xf32>
    %81 = tpu.matmul %78, %80, %cst_59 {dimension_numbers = #tpu.dot_dimension_numbers<[1], [0], [0], [1], [0, 0, 1, 1], [], []>} : vector<32x128xbf16>, vector<128x128xbf16>, vector<32x128xf32> -> vector<32x128xf32>
    %82 = arith.addf %73, %81 : vector<32x128xf32>
    %c0_60 = arith.constant 0 : index
    %c0_61 = arith.constant 0 : index
    %c0_62 = arith.constant 0 : index
    %c0_63 = arith.constant 0 : index
    %83 = vector.load %arg4[%c0_60, %c0_61, %c0_62, %c0_63] : memref<1x4x8x128xbf16, #tpu.memory_space<vmem>>, vector<1x4x8x128xbf16>
    %84 = vector.shape_cast %83 : vector<1x4x8x128xbf16> to vector<4x8x128xbf16>
    %85 = vector.shape_cast %84 : vector<4x8x128xbf16> to vector<32x128xbf16>
    %c0_64 = arith.constant 0 : index
    %c0_65 = arith.constant 0 : index
    %86 = vector.load %arg5[%c0_64, %c0_65] : memref<128x128xbf16, #tpu.memory_space<vmem>>, vector<128x128xbf16>
    %cst_66 = arith.constant dense<0.000000e+00> : vector<32x128xf32>
    %87 = tpu.matmul %85, %86, %cst_66 {dimension_numbers = #tpu.dot_dimension_numbers<[1], [0], [0], [1], [0, 0, 1, 1], [], []>} : vector<32x128xbf16>, vector<128x128xbf16>, vector<32x128xf32> -> vector<32x128xf32>
    %cst_67 = arith.constant 0.857142865 : f32
    %88 = vector.broadcast %cst_67 : f32 to vector<32x128xf32>
    %89 = arith.divf %82, %88 : vector<32x128xf32>
    %90 = math.roundeven %89 : vector<32x128xf32>
    %cst_68 = arith.constant -8.000000e+00 : f32
    %cst_69 = arith.constant 7.000000e+00 : f32
    %91 = vector.broadcast %cst_68 : f32 to vector<32x128xf32>
    %92 = arith.maximumf %91, %90 : vector<32x128xf32>
    %93 = vector.broadcast %cst_69 : f32 to vector<32x128xf32>
    %94 = arith.minimumf %93, %92 : vector<32x128xf32>
    %cst_70 = arith.constant 0.857142865 : f32
    %95 = vector.broadcast %cst_70 : f32 to vector<32x128xf32>
    %96 = arith.mulf %94, %95 : vector<32x128xf32>
    %cst_71 = arith.constant 0.857142865 : f32
    %97 = vector.broadcast %cst_71 : f32 to vector<32x128xf32>
    %98 = arith.divf %87, %97 : vector<32x128xf32>
    %99 = math.roundeven %98 : vector<32x128xf32>
    %cst_72 = arith.constant -8.000000e+00 : f32
    %cst_73 = arith.constant 7.000000e+00 : f32
    %100 = vector.broadcast %cst_72 : f32 to vector<32x128xf32>
    %101 = arith.maximumf %100, %99 : vector<32x128xf32>
    %102 = vector.broadcast %cst_73 : f32 to vector<32x128xf32>
    %103 = arith.minimumf %102, %101 : vector<32x128xf32>
    %cst_74 = arith.constant 0.857142865 : f32
    %104 = vector.broadcast %cst_74 : f32 to vector<32x128xf32>
    %105 = arith.mulf %103, %104 : vector<32x128xf32>
    %106 = arith.addf %96, %105 : vector<32x128xf32>
    %cst_75 = arith.constant 0.000000e+00 : f32
    %107 = vector.broadcast %cst_75 : f32 to vector<32x128xf32>
    %108 = arith.maximumf %106, %107 : vector<32x128xf32>
    %cst_76 = arith.constant 4.000000e-01 : f32
    %109 = vector.broadcast %cst_76 : f32 to vector<32x128xf32>
    %110 = arith.divf %108, %109 : vector<32x128xf32>
    %111 = math.roundeven %110 : vector<32x128xf32>
    %cst_77 = arith.constant 0.000000e+00 : f32
    %cst_78 = arith.constant 1.500000e+01 : f32
    %112 = vector.broadcast %cst_77 : f32 to vector<32x128xf32>
    %113 = arith.maximumf %112, %111 : vector<32x128xf32>
    %114 = vector.broadcast %cst_78 : f32 to vector<32x128xf32>
    %115 = arith.minimumf %114, %113 : vector<32x128xf32>
    %cst_79 = arith.constant 4.000000e-01 : f32
    %116 = vector.broadcast %cst_79 : f32 to vector<32x128xf32>
    %117 = arith.mulf %115, %116 : vector<32x128xf32>
    %118 = vector.shape_cast %117 : vector<32x128xf32> to vector<4x8x128xf32>
    %c0_80 = arith.constant 0 : index
    %c0_81 = arith.constant 0 : index
    %c0_82 = arith.constant 0 : index
    %c0_83 = arith.constant 0 : index
    %119 = vector.load %arg6[%c0_80, %c0_81, %c0_82, %c0_83] : memref<1x4x8x128xf32, #tpu.memory_space<vmem>>, vector<1x4x8x128xf32>
    %120 = vector.shape_cast %119 : vector<1x4x8x128xf32> to vector<4x8x128xf32>
    %121 = vector.shape_cast %118 : vector<4x8x128xf32> to vector<1x4x8x128xf32>
    tpu.vector_store %arg6[%c0_80, %c0_81, %c0_82, %c0_83], %121 {strides = array<i32>} : memref<1x4x8x128xf32, #tpu.memory_space<vmem>>, vector<1x4x8x128xf32>,
    return
  }
  func.func @transform_0(%arg0: i32, %arg1: i32) -> (i32, i32, i32, i32) {
    %c0_i32 = arith.constant 0 : i32
    %c0_i32_0 = arith.constant 0 : i32
    %c0_i32_1 = arith.constant 0 : i32
    %c0_i32_2 = arith.constant 0 : i32
    return %arg0, %c0_i32, %c0_i32_0, %c0_i32_1 : i32, i32, i32, i32
  }
  func.func @transform_1(%arg0: i32, %arg1: i32) -> (i32, i32, i32) {
    %c0_i32 = arith.constant 0 : i32
    %c0_i32_0 = arith.constant 0 : i32
    %c0_i32_1 = arith.constant 0 : i32
    %c0_i32_2 = arith.constant 0 : i32
    return %c0_i32, %c0_i32_0, %c0_i32_1 : i32, i32, i32
  }
  func.func @transform_2(%arg0: i32, %arg1: i32) -> (i32, i32, i32, i32) {
    %c0_i32 = arith.constant 0 : i32
    %c0_i32_0 = arith.constant 0 : i32
    %c0_i32_1 = arith.constant 0 : i32
    return %arg0, %arg1, %c0_i32, %c0_i32_0 : i32, i32, i32, i32
  }
  func.func @transform_3(%arg0: i32, %arg1: i32) -> (i32, i32) {
    %c0_i32 = arith.constant 0 : i32
    %c0_i32_0 = arith.constant 0 : i32
    %c0_i32_1 = arith.constant 0 : i32
    return %c0_i32, %c0_i32_0 : i32, i32
  }
  func.func @transform_4(%arg0: i32, %arg1: i32) -> (i32, i32, i32, i32) {
    %c0_i32 = arith.constant 0 : i32
    %c0_i32_0 = arith.constant 0 : i32
    %c0_i32_1 = arith.constant 0 : i32
    return %arg0, %arg1, %c0_i32, %c0_i32_0 : i32, i32, i32, i32
  }
}

</mosaic_0001>

<llo_original>
// kernel: a_call__.2
$region0: #{a_call__.2}
  #allocation0 [shape = 'u32[]', space=smem, size = 0x4, offset = 0x4, fixed_abs, tag = 'smem constant byte address 0x4 - core index']
  #allocation1 [shape = 'u32[144,128]{1,0:T(1,128)}', space=vmem, size = 0x12000, scoped, tag = 'internal scratch']
  %s0 = inlined_call_operand.vmem [shape: bf16[2,8,8,128], index: 0, kind: input, shape index: {}]
  %s1 = inlined_call_operand.vmem [shape: bf16[128,128], index: 1, kind: input, shape index: {}]
  %s2 = inlined_call_operand.vmem [shape: bf16[2,8,8,128], index: 2, kind: output, shape index: {}]
  %s3 = sld [smem:[#allocation0]]
  $region41: #{a_call__.2} parent=0
    _
  %s5 = ssub.s32 1, %s3
  %s6 = scalar_select 0, %s5, %s3
  loop: start=0, step=1, limit=6
  $region2: #{a_call__.2} parent=0 // loop_pre_header
    _
  $region3: #{a_call__.2} parent=0 // loop_header
    %s8 = sphi 0, %s12
    %p9 = scmp.ge.s32.totalorder %s8, 6
    %s15 = sphi 0, %s27
    %s16 = sphi 0, %s23
    %s17 = sphi 0, %s15
    %s18 = sphi 0, %s16
    %s19 = sphi 0, %s17
    %s20 = sphi 0, %s18
    %s32 = sphi 0, %s34
    %s35 = sphi 0, %s32
    %s36 = sphi 0, %s35
    %s52 = sphi 0, %s36
    %s56 = sphi 0, %s56
    %s58 = sphi 0, %s56
    %s59 = sphi 0, %s58
    %s73 = sphi 0, %s59
    %s81 = sphi 0, %s83
    %s84 = sphi 0, %s81
    %s85 = sphi 0, %s84
    %s101 = sphi 0, %s85
  $region4: #{a_call__.2} parent=0 // loop_header_branch
    %11 = sbr.rel (%p9) target = $region8
  $region5: #{a_call__.2} parent=0 // loop_body
    %s13 = ssub.s32 %s8, 1
    %s14 = ssub.s32 %s8, 2
    %s21 = sadd.s32 1, %s16
    %p22 = scmp.ge.s32.totalorder %s21, 2
    %s23 = scalar_select %p22, 0, %s21
    %s24 = sadd.s32 1, %s15
    %s25 = scalar_select %p22, %s24, %s15
    %p26 = scmp.ge.s32.totalorder %s25, 2
    %s27 = scalar_select %p26, 0, %s25
    %s28 = ssub.s32 %s15, %s27
    %s29 = ssub.s32 %s16, %s23
    %s30 = sor.u32 %s28, %s29
    %p31 = scmp.eq.s32.totalorder %s30, 0
    %s33 = sadd.s32 %s32, 1
    %s34 = scalar_select %p31, %s32, %s33
    %p37 = pneg %p31
    %p38 = scmp.eq.s32.totalorder %s8, 3
    %p39 = por %p37, %p38
    %p40 = scmp.ne.s32.totalorder %s32, %s35
    %p41 = scmp.eq.s32.totalorder %s8, 0
    %p42 = por %p40, %p41
    %p43 = scmp.ne.s32.totalorder %s32, %s35
    %p44 = scmp.eq.s32.totalorder %s13, 3
    %p45 = por %p43, %p44
    %p46 = scmp.ne.s32.totalorder %s35, %s36
    %p47 = scmp.eq.s32.totalorder %s13, 0
    %p48 = por %p46, %p47
    %p49 = scmp.ne.s32.totalorder %s35, %s36
    %p50 = scmp.eq.s32.totalorder %s14, 3
    %p51 = por %p49, %p50
    %p53 = scmp.ne.s32.totalorder %s36, %s52
    %p54 = scmp.eq.s32.totalorder %s14, 0
    %p55 = por %p53, %p54
    %s57 = sadd.s32 %s56, 1
    %p60 = scmp.eq.s32.totalorder %s8, 3
    %p61 = scmp.ne.s32.totalorder %s56, %s58
    %p62 = scmp.eq.s32.totalorder %s8, 0
    %p63 = por %p61, %p62
    %p64 = scmp.ne.s32.totalorder %s56, %s58
    %p65 = scmp.eq.s32.totalorder %s13, 3
    %p66 = por %p64, %p65
    %p67 = scmp.ne.s32.totalorder %s58, %s59
    %p68 = scmp.eq.s32.totalorder %s13, 0
    %p69 = por %p67, %p68
    %p70 = scmp.ne.s32.totalorder %s58, %s59
    %p71 = scmp.eq.s32.totalorder %s14, 3
    %p72 = por %p70, %p71
    %p74 = scmp.ne.s32.totalorder %s59, %s73
    %p75 = scmp.eq.s32.totalorder %s14, 0
    %p76 = por %p74, %p75
    %s77 = ssub.s32 %s15, %s27
    %s78 = ssub.s32 %s16, %s23
    %s79 = sor.u32 %s77, %s78
    %p80 = scmp.eq.s32.totalorder %s79, 0
    %s82 = sadd.s32 %s81, 1
    %s83 = scalar_select %p80, %s81, %s82
    %p86 = pneg %p80
    %p87 = scmp.eq.s32.totalorder %s8, 3
    %p88 = por %p86, %p87
    %p89 = scmp.ne.s32.totalorder %s81, %s84
    %p90 = scmp.eq.s32.totalorder %s8, 0
    %p91 = por %p89, %p90
    %p92 = scmp.ne.s32.totalorder %s81, %s84
    %p93 = scmp.eq.s32.totalorder %s13, 3
    %p94 = por %p92, %p93
    %p95 = scmp.ne.s32.totalorder %s84, %s85
    %p96 = scmp.eq.s32.totalorder %s13, 0
    %p97 = por %p95, %p96
    %p98 = scmp.ne.s32.totalorder %s84, %s85
    %p99 = scmp.eq.s32.totalorder %s14, 3
    %p100 = por %p98, %p99
    %p102 = scmp.ne.s32.totalorder %s85, %s101
    %p103 = scmp.eq.s32.totalorder %s14, 0
    %p104 = por %p102, %p103
    %p105 = scmp.le.s32.totalorder 1, %s8
    %p106 = scmp.lt.s32.totalorder %s8, 5
    %p107 = pnand %p105, %p106
    %p108 = pneg %p107
    // Predicated region
    $region9: #{a_call__.2} parent=5 // pred_check
      _
    $region10: #{a_call__.2} parent=5 // pred_check_branch
      %110 = sbr.rel (%p107) target = $region12
    $region11: #{a_call__.2} parent=5 // pred_region
      %s111 = ssub.s32 %s8, 1
      // Predicated region
      $region13: #{a_call__.2} parent=11 // pred_check
        %p112 = pneg %p69
      $region14: #{a_call__.2} parent=11 // pred_check_branch
        %114 = sbr.rel (%p112) target = $region16
      $region15: #{a_call__.2} parent=11 // pred_region
        _
      $region16: #{a_call__.2} parent=11 // pred_fallthru
        _
    $region12: #{a_call__.2} parent=5 // pred_fallthru
      _
    %p115 = scmp.lt.s32.totalorder %s8, 4
    // Predicated region
    $region17: #{a_call__.2} parent=5 // pred_check
      %p116 = pneg %p115
    $region18: #{a_call__.2} parent=5 // pred_check_branch
      %118 = sbr.rel (%p116) target = $region20
    $region19: #{a_call__.2} parent=5 // pred_region
      // Predicated region
      $region21: #{a_call__.2} parent=19 // pred_check
        %p119 = pneg %p42
      $region22: #{a_call__.2} parent=19 // pred_check_branch
        %121 = sbr.rel (%p119) target = $region24
      $region23: #{a_call__.2} parent=19 // pred_region
        %s122 = smul.u32 4, %s16
        %p123 = scmp.lt.s32.totalorder %s15, 1
        %s124 = scalar_select %p123, %s15, 1
        %p125 = scmp.lt.s32.totalorder %s122, 7
        %s126 = scalar_select %p125, %s122, 7
        %s127 = smul.addr %s124, 8
        %s128 = sadd.s32 %s126, %s127
        %s129 = smul.addr %s128, 4
        %s130 = scalar_lea.vmem %s0, %s129
        %s131 = smul.u32 4, %s16
      $region24: #{a_call__.2} parent=19 // pred_fallthru
        _
    $region20: #{a_call__.2} parent=5 // pred_fallthru
      _
    %p132 = scmp.le.s32.totalorder 1, %s8
    %p133 = scmp.lt.s32.totalorder %s8, 5
    %p134 = pnand %p132, %p133
    %p135 = pneg %p134
    // Predicated region
    $region25: #{a_call__.2} parent=5 // pred_check
      _
    $region26: #{a_call__.2} parent=5 // pred_check_branch
      %137 = sbr.rel (%p134) target = $region28
    $region27: #{a_call__.2} parent=5 // pred_region
      %s138 = ssub.s32 %s8, 1
      %s139 = smul.u32 4, %s18
      %p140 = scmp.lt.s32.totalorder %s17, 1
      %s141 = scalar_select %p140, %s17, 1
      %p142 = scmp.lt.s32.totalorder %s139, 7
      %s143 = scalar_select %p142, %s139, 7
      %s144 = smul.addr %s141, 8
      %s145 = sadd.s32 %s143, %s144
      %s146 = smul.addr %s145, 4
      %s147 = scalar_lea.vmem %s0, %s146
      %p148 = pneg %p48
      %p149 = pneg %p45
      %p150 = pneg %p69
      %p151 = pneg %p66
      %p152 = pneg %p97
      %p153 = pneg %p94
      %s154 = smul.u32 4, %s18
      %p155 = scmp.lt.s32.totalorder %s17, 1
      %s156 = scalar_select %p155, %s17, 1
      %p157 = scmp.lt.s32.totalorder %s154, 7
      %s158 = scalar_select %p157, %s154, 7
      %s159 = smul.addr %s156, 8
      %s160 = sadd.s32 %s158, %s159
      %s161 = smul.addr %s160, 4
      %s162 = scalar_lea.vmem %s2, %s161
      %s163 = smul.u32 4, %s18
      %p164 = scmp.lt.s32.totalorder %s17, 1
      %s165 = scalar_select %p164, %s17, 1
      %p166 = scmp.lt.s32.totalorder %s163, 7
      %s167 = scalar_select %p166, %s163, 7
      %s168 = smul.addr %s165, 8
      %s169 = sadd.s32 %s167, %s168
      %s170 = smul.addr %s169, 4
      %s171 = scalar_lea.vmem %s0, %s170
      %s172 = smul.u32 4, %s18
      %s173 = smul.u32 4, %s18
      %p174 = scmp.lt.s32.totalorder %s17, 1
      %s175 = scalar_select %p174, %s17, 1
      %p176 = scmp.lt.s32.totalorder %s173, 7
      %s177 = scalar_select %p176, %s173, 7
      %s178 = smul.addr %s175, 8
      %s179 = sadd.s32 %s177, %s178
      %s180 = smul.addr %s179, 4
      %s181 = scalar_lea.vmem %s2, %s180
      %s182 = smul.u32 4, %s18
      %v184 = vld [vmem:[%s171] sm:$0xf]
      %v185 = vld [vmem:[%s171 + $0x4] sm:$0xf]
      %v186 = vld [vmem:[%s171 + $0x8] sm:$0xf]
      %v187 = vld [vmem:[%s171 + $0xc] sm:$0xf]
      %v188 = vld [vmem:[%s1] sm:$0xf]
      %v189 = vld [vmem:[%s1 + $0x4] sm:$0xf]
      %v190 = vld [vmem:[%s1 + $0x8] sm:$0xf]
      %v191 = vld [vmem:[%s1 + $0xc] sm:$0xf]
      %v192 = vld [vmem:[%s1 + $0x10] sm:$0xf]
      %v193 = vld [vmem:[%s1 + $0x14] sm:$0xf]
      %v194 = vld [vmem:[%s1 + $0x18] sm:$0xf]
      %v195 = vld [vmem:[%s1 + $0x1c] sm:$0xf]
      %v196 = vld [vmem:[%s1 + $0x20] sm:$0xf]
      %v197 = vld [vmem:[%s1 + $0x24] sm:$0xf]
      %v198 = vld [vmem:[%s1 + $0x28] sm:$0xf]
      %v199 = vld [vmem:[%s1 + $0x2c] sm:$0xf]
      %v200 = vld [vmem:[%s1 + $0x30] sm:$0xf]
      %v201 = vld [vmem:[%s1 + $0x34] sm:$0xf]
      %v202 = vld [vmem:[%s1 + $0x38] sm:$0xf]
      %v203 = vld [vmem:[%s1 + $0x3c] sm:$0xf]
      %v208 = vunpack.c.l.b16 %v184
      %v209 = vunpack.c.l.b16 %v185
      %v210 = vunpack.c.l.b16 %v186
      %v211 = vunpack.c.l.b16 %v187
      %v212 = vpack.c.b16 %v209, %v208
      %v213 = vpack.c.b16 %v211, %v210
      %v232 = vunpack.c.l.b16 %v188
      %v233 = vunpack.c.l.b16 %v189
      %v234 = vunpack.c.l.b16 %v190
      %v235 = vunpack.c.l.b16 %v191
      %v236 = vunpack.c.l.b16 %v192
      %v237 = vunpack.c.l.b16 %v193
      %v238 = vunpack.c.l.b16 %v194
      %v239 = vunpack.c.l.b16 %v195
      %v240 = vunpack.c.l.b16 %v196
      %v241 = vunpack.c.l.b16 %v197
      %v242 = vunpack.c.l.b16 %v198
      %v243 = vunpack.c.l.b16 %v199
      %v244 = vunpack.c.l.b16 %v200
      %v245 = vunpack.c.l.b16 %v201
      %v246 = vunpack.c.l.b16 %v202
      %v247 = vunpack.c.l.b16 %v203
      %v248 = vpack.c.b16 %v233, %v232
      %v249 = vpack.c.b16 %v235, %v234
      %v250 = vpack.c.b16 %v237, %v236
      %v251 = vpack.c.b16 %v239, %v238
      %v252 = vpack.c.b16 %v241, %v240
      %v253 = vpack.c.b16 %v243, %v242
      %v254 = vpack.c.b16 %v245, %v244
      %v255 = vpack.c.b16 %v247, %v246
      %264 = vmatprep.subr.bf16.mxu0 0
      %265 = vmatpush1.bf16.msra.mxu0 %v255
      %266 = vmatprep.subr.bf16.mxu0 0
      %267 = vmatpush1.bf16.msra.mxu0 %v254
      %268 = vmatprep.subr.bf16.mxu0 0
      %269 = vmatpush1.bf16.msra.mxu0 %v253
      %270 = vmatprep.subr.bf16.mxu0 0
      %271 = vmatpush1.bf16.msra.mxu0 %v252
      %272 = vmatprep.subr.bf16.mxu0 0
      %273 = vmatpush1.bf16.msra.mxu0 %v251
      %274 = vmatprep.subr.bf16.mxu0 0
      %275 = vmatpush1.bf16.msra.mxu0 %v250
      %276 = vmatprep.subr.bf16.mxu0 0
      %277 = vmatpush1.bf16.msra.mxu0 %v249
      %278 = vmatprep.subr.bf16.mxu0 0
      %279 = vmatpush1.bf16.msra.mxu0 %v248
      %280 = vmatprep.subr.bf16.mxu0 0
      %281 = vmatpush2.bf16.msra.mxu0 0
      %282 = vmatprep.subr.bf16.mxu0 0
      %283 = vmatpush2.bf16.msra.mxu0 0
      %284 = vmatprep.subr.bf16.mxu0 0
      %285 = vmatpush2.bf16.msra.mxu0 0
      %286 = vmatprep.subr.bf16.mxu0 0
      %287 = vmatpush2.bf16.msra.mxu0 0
      %288 = vmatprep.subr.bf16.mxu0 0
      %289 = vmatpush2.bf16.msra.mxu0 0
      %290 = vmatprep.subr.bf16.mxu0 0
      %291 = vmatpush2.bf16.msra.mxu0 0
      %292 = vmatprep.subr.bf16.mxu0 0
      %293 = vmatpush2.bf16.msra.mxu0 0
      %294 = vmatprep.subr.bf16.mxu0 0
      %295 = vmatpush2.bf16.msra.mxu0 0
      %296 = vmatprep.mubr.bf16.mxu0 0
      %297 = vmatmul.mubr.bf16.gmra.mxu0 %v212
      %v298 = vpop.f32.mrf.mxu0
      %v299 = vadd.f32 0.0, %v298
      %v300 = vpop.f32.mrf.mxu0
      %v301 = vpop.f32.mrf.mxu0
      %v302 = vadd.f32 0.0, %v301
      %v303 = vpop.f32.mrf.mxu0
      %304 = vmatprep.mubr.bf16.mxu0 0
      %305 = vmatmul.mubr.bf16.gmra.mxu0 %v213
      %v306 = vpop.f32.mrf.mxu0
      %v307 = vadd.f32 0.0, %v306
      %v308 = vpop.f32.mrf.mxu0
      %v309 = vpop.f32.mrf.mxu0
      %v310 = vadd.f32 0.0, %v309
      %v311 = vpop.f32.mrf.mxu0
      %312 = vdwg.mxu0
      %v313 = vmax.f32 %v299, 0.0
      %v314 = vmax.f32 %v302, 0.0
      %v315 = vmax.f32 %v307, 0.0
      %v316 = vmax.f32 %v310, 0.0
      %v317 = vrcp.pop 0.4
      %v318 = vmul.f32 %v313, %v317
      %v319 = vmul.f32 %v314, %v317
      %v320 = vmul.f32 %v315, %v317
      %v321 = vmul.f32 %v316, %v317
      %v322 = vround.ne.pseudo %v318
      %v323 = vround.ne.pseudo %v319
      %v324 = vround.ne.pseudo %v320
      %v325 = vround.ne.pseudo %v321
      %v326 = vmax.f32 %v322, 0.0
      %v327 = vmax.f32 %v323, 0.0
      %v328 = vmax.f32 %v324, 0.0
      %v329 = vmax.f32 %v325, 0.0
      %v330 = vmin.f32 %v326, 15.0
      %v331 = vmin.f32 %v327, 15.0
      %v332 = vmin.f32 %v328, 15.0
      %v333 = vmin.f32 %v329, 15.0
      %v334 = vmul.f32 %v330, 0.4
      %v335 = vmul.f32 %v331, 0.4
      %v336 = vmul.f32 %v332, 0.4
      %v337 = vmul.f32 %v333, 0.4
      %v338 = vpack.c.bf16 %v334, %v334
      %v339 = vpack.c.bf16 %v335, %v335
      %v340 = vpack.c.bf16 %v336, %v336
      %v341 = vpack.c.bf16 %v337, %v337
      %342 = vst [vmem:[%s181] sm:$0xf] %v338
      %343 = vst [vmem:[%s181 + $0x4] sm:$0xf] %v339
      %344 = vst [vmem:[%s181 + $0x8] sm:$0xf] %v340
      %345 = vst [vmem:[%s181 + $0xc] sm:$0xf] %v341
      %s346 = smul.u32 4, %s18
      %p347 = scmp.lt.s32.totalorder %s17, 1
      %s348 = scalar_select %p347, %s17, 1
      %p349 = scmp.lt.s32.totalorder %s346, 7
      %s350 = scalar_select %p349, %s346, 7
      %s351 = smul.addr %s348, 8
      %s352 = sadd.s32 %s350, %s351
      %s353 = smul.addr %s352, 4
      %s354 = scalar_lea.vmem %s2, %s353
      // Predicated region
      $region29: #{a_call__.2} parent=27 // pred_check
        %p355 = pneg %p94
      $region30: #{a_call__.2} parent=27 // pred_check_branch
        %357 = sbr.rel (%p355) target = $region32
      $region31: #{a_call__.2} parent=27 // pred_region
        %s358 = smul.u32 4, %s18
      $region32: #{a_call__.2} parent=27 // pred_fallthru
        _
    $region28: #{a_call__.2} parent=5 // pred_fallthru
      _
    %p359 = scmp.le.s32.totalorder 2, %s8
    // Predicated region
    $region33: #{a_call__.2} parent=5 // pred_check
      %p360 = pneg %p359
    $region34: #{a_call__.2} parent=5 // pred_check_branch
      %362 = sbr.rel (%p360) target = $region36
    $region35: #{a_call__.2} parent=5 // pred_region
      %s363 = ssub.s32 %s8, 2
      // Predicated region
      $region37: #{a_call__.2} parent=35 // pred_check
        %p364 = pneg %p100
      $region38: #{a_call__.2} parent=35 // pred_check_branch
        %366 = sbr.rel (%p364) target = $region40
      $region39: #{a_call__.2} parent=35 // pred_region
        %s367 = smul.u32 4, %s20
        %p368 = scmp.lt.s32.totalorder %s19, 1
        %s369 = scalar_select %p368, %s19, 1
        %p370 = scmp.lt.s32.totalorder %s367, 7
        %s371 = scalar_select %p370, %s367, 7
        %s372 = smul.addr %s369, 8
        %s373 = sadd.s32 %s371, %s372
        %s374 = smul.addr %s373, 4
        %s375 = scalar_lea.vmem %s2, %s374
      $region40: #{a_call__.2} parent=35 // pred_fallthru
        _
    $region36: #{a_call__.2} parent=5 // pred_fallthru
      _
  $region6: #{a_call__.2} parent=0 // loop_footer
    %s12 = sadd.s32 1, %s8
  $region7: #{a_call__.2} parent=0 // loop_footer_branch
    %7 = sbr.rel target = $region3
  $region8: #{a_call__.2} parent=0 // loop_exit
    _

// kernel: a_call__.3
$region0: #{a_call__.3}
  #allocation0 [shape = 'u32[]', space=smem, size = 0x4, offset = 0x4, fixed_abs, tag = 'smem constant byte address 0x4 - core index']
  #allocation1 [shape = 'u32[144,128]{1,0:T(1,128)}', space=vmem, size = 0x12000, scoped, tag = 'internal scratch']
  %s0 = inlined_call_operand.vmem [shape: bf16[2,10,10,128], index: 0, kind: input, shape index: {}]
  %s1 = inlined_call_operand.vmem [shape: bf16[9,128,128], index: 1, kind: input, shape index: {}]
  %s2 = inlined_call_operand.vmem [shape: bf16[2,8,8,128], index: 2, kind: input, shape index: {}]
  %s3 = inlined_call_operand.vmem [shape: bf16[128,128], index: 3, kind: input, shape index: {}]
  %s4 = inlined_call_operand.vmem [shape: f32[2,8,8,128], index: 4, kind: output, shape index: {}]
  %s5 = sld [smem:[#allocation0]]
  $region49: #{a_call__.3} parent=0
    _
  %s7 = ssub.s32 1, %s5
  %s8 = scalar_select 0, %s7, %s5
  loop: start=0, step=1, limit=6
  $region2: #{a_call__.3} parent=0 // loop_pre_header
    _
  $region3: #{a_call__.3} parent=0 // loop_header
    %s10 = sphi 0, %s14
    %p11 = scmp.ge.s32.totalorder %s10, 6
    %s17 = sphi 0, %s29
    %s18 = sphi 0, %s25
    %s19 = sphi 0, %s17
    %s20 = sphi 0, %s18
    %s21 = sphi 0, %s19
    %s22 = sphi 0, %s20
    %s32 = sphi 0, %s34
    %s35 = sphi 0, %s32
    %s36 = sphi 0, %s35
    %s52 = sphi 0, %s36
    %s56 = sphi 0, %s56
    %s58 = sphi 0, %s56
    %s59 = sphi 0, %s58
    %s73 = sphi 0, %s59
    %s81 = sphi 0, %s83
    %s84 = sphi 0, %s81
    %s85 = sphi 0, %s84
    %s101 = sphi 0, %s85
    %s105 = sphi 0, %s105
    %s107 = sphi 0, %s105
    %s108 = sphi 0, %s107
    %s122 = sphi 0, %s108
    %s130 = sphi 0, %s132
    %s133 = sphi 0, %s130
    %s134 = sphi 0, %s133
    %s150 = sphi 0, %s134
  $region4: #{a_call__.3} parent=0 // loop_header_branch
    %13 = sbr.rel (%p11) target = $region8
  $region5: #{a_call__.3} parent=0 // loop_body
    %s15 = ssub.s32 %s10, 1
    %s16 = ssub.s32 %s10, 2
    %s23 = sadd.s32 1, %s18
    %p24 = scmp.ge.s32.totalorder %s23, 2
    %s25 = scalar_select %p24, 0, %s23
    %s26 = sadd.s32 1, %s17
    %s27 = scalar_select %p24, %s26, %s17
    %p28 = scmp.ge.s32.totalorder %s27, 2
    %s29 = scalar_select %p28, 0, %s27
    %s30 = ssub.s32 %s17, %s29
    %p31 = scmp.eq.s32.totalorder %s30, 0
    %s33 = sadd.s32 %s32, 1
    %s34 = scalar_select %p31, %s32, %s33
    %p37 = pneg %p31
    %p38 = scmp.eq.s32.totalorder %s10, 3
    %p39 = por %p37, %p38
    %p40 = scmp.ne.s32.totalorder %s32, %s35
    %p41 = scmp.eq.s32.totalorder %s10, 0
    %p42 = por %p40, %p41
    %p43 = scmp.ne.s32.totalorder %s32, %s35
    %p44 = scmp.eq.s32.totalorder %s15, 3
    %p45 = por %p43, %p44
    %p46 = scmp.ne.s32.totalorder %s35, %s36
    %p47 = scmp.eq.s32.totalorder %s15, 0
    %p48 = por %p46, %p47
    %p49 = scmp.ne.s32.totalorder %s35, %s36
    %p50 = scmp.eq.s32.totalorder %s16, 3
    %p51 = por %p49, %p50
    %p53 = scmp.ne.s32.totalorder %s36, %s52
    %p54 = scmp.eq.s32.totalorder %s16, 0
    %p55 = por %p53, %p54
    %s57 = sadd.s32 %s56, 1
    %p60 = scmp.eq.s32.totalorder %s10, 3
    %p61 = scmp.ne.s32.totalorder %s56, %s58
    %p62 = scmp.eq.s32.totalorder %s10, 0
    %p63 = por %p61, %p62
    %p64 = scmp.ne.s32.totalorder %s56, %s58
    %p65 = scmp.eq.s32.totalorder %s15, 3
    %p66 = por %p64, %p65
    %p67 = scmp.ne.s32.totalorder %s58, %s59
    %p68 = scmp.eq.s32.totalorder %s15, 0
    %p69 = por %p67, %p68
    %p70 = scmp.ne.s32.totalorder %s58, %s59
    %p71 = scmp.eq.s32.totalorder %s16, 3
    %p72 = por %p70, %p71
    %p74 = scmp.ne.s32.totalorder %s59, %s73
    %p75 = scmp.eq.s32.totalorder %s16, 0
    %p76 = por %p74, %p75
    %s77 = ssub.s32 %s17, %s29
    %s78 = ssub.s32 %s18, %s25
    %s79 = sor.u32 %s77, %s78
    %p80 = scmp.eq.s32.totalorder %s79, 0
    %s82 = sadd.s32 %s81, 1
    %s83 = scalar_select %p80, %s81, %s82
    %p86 = pneg %p80
    %p87 = scmp.eq.s32.totalorder %s10, 3
    %p88 = por %p86, %p87
    %p89 = scmp.ne.s32.totalorder %s81, %s84
    %p90 = scmp.eq.s32.totalorder %s10, 0
    %p91 = por %p89, %p90
    %p92 = scmp.ne.s32.totalorder %s81, %s84
    %p93 = scmp.eq.s32.totalorder %s15, 3
    %p94 = por %p92, %p93
    %p95 = scmp.ne.s32.totalorder %s84, %s85
    %p96 = scmp.eq.s32.totalorder %s15, 0
    %p97 = por %p95, %p96
    %p98 = scmp.ne.s32.totalorder %s84, %s85
    %p99 = scmp.eq.s32.totalorder %s16, 3
    %p100 = por %p98, %p99
    %p102 = scmp.ne.s32.totalorder %s85, %s101
    %p103 = scmp.eq.s32.totalorder %s16, 0
    %p104 = por %p102, %p103
    %s106 = sadd.s32 %s105, 1
    %p109 = scmp.eq.s32.totalorder %s10, 3
    %p110 = scmp.ne.s32.totalorder %s105, %s107
    %p111 = scmp.eq.s32.totalorder %s10, 0
    %p112 = por %p110, %p111
    %p113 = scmp.ne.s32.totalorder %s105, %s107
    %p114 = scmp.eq.s32.totalorder %s15, 3
    %p115 = por %p113, %p114
    %p116 = scmp.ne.s32.totalorder %s107, %s108
    %p117 = scmp.eq.s32.totalorder %s15, 0
    %p118 = por %p116, %p117
    %p119 = scmp.ne.s32.totalorder %s107, %s108
    %p120 = scmp.eq.s32.totalorder %s16, 3
    %p121 = por %p119, %p120
    %p123 = scmp.ne.s32.totalorder %s108, %s122
    %p124 = scmp.eq.s32.totalorder %s16, 0
    %p125 = por %p123, %p124
    %s126 = ssub.s32 %s17, %s29
    %s127 = ssub.s32 %s18, %s25
    %s128 = sor.u32 %s126, %s127
    %p129 = scmp.eq.s32.totalorder %s128, 0
    %s131 = sadd.s32 %s130, 1
    %s132 = scalar_select %p129, %s130, %s131
    %p135 = pneg %p129
    %p136 = scmp.eq.s32.totalorder %s10, 3
    %p137 = por %p135, %p136
    %p138 = scmp.ne.s32.totalorder %s130, %s133
    %p139 = scmp.eq.s32.totalorder %s10, 0
    %p140 = por %p138, %p139
    %p141 = scmp.ne.s32.totalorder %s130, %s133
    %p142 = scmp.eq.s32.totalorder %s15, 3
    %p143 = por %p141, %p142
    %p144 = scmp.ne.s32.totalorder %s133, %s134
    %p145 = scmp.eq.s32.totalorder %s15, 0
    %p146 = por %p144, %p145
    %p147 = scmp.ne.s32.totalorder %s133, %s134
    %p148 = scmp.eq.s32.totalorder %s16, 3
    %p149 = por %p147, %p148
    %p151 = scmp.ne.s32.totalorder %s134, %s150
    %p152 = scmp.eq.s32.totalorder %s16, 0
    %p153 = por %p151, %p152
    %p154 = scmp.le.s32.totalorder 1, %s10
    %p155 = scmp.lt.s32.totalorder %s10, 5
    %p156 = pnand %p154, %p155
    %p157 = pneg %p156
    // Predicated region
    $region9: #{a_call__.3} parent=5 // pred_check
      _
    $region10: #{a_call__.3} parent=5 // pred_check_branch
      %159 = sbr.rel (%p156) target = $region12
    $region11: #{a_call__.3} parent=5 // pred_region
      %s160 = ssub.s32 %s10, 1
      // Predicated region
      $region13: #{a_call__.3} parent=11 // pred_check
        %p161 = pneg %p69
      $region14: #{a_call__.3} parent=11 // pred_check_branch
        %163 = sbr.rel (%p161) target = $region16
      $region15: #{a_call__.3} parent=11 // pred_region
        _
      $region16: #{a_call__.3} parent=11 // pred_fallthru
        _
      // Predicated region
      $region17: #{a_call__.3} parent=11 // pred_check
        %p164 = pneg %p118
      $region18: #{a_call__.3} parent=11 // pred_check_branch
        %166 = sbr.rel (%p164) target = $region20
      $region19: #{a_call__.3} parent=11 // pred_region
        _
      $region20: #{a_call__.3} parent=11 // pred_fallthru
        _
    $region12: #{a_call__.3} parent=5 // pred_fallthru
      _
    %p167 = scmp.lt.s32.totalorder %s10, 4
    // Predicated region
    $region21: #{a_call__.3} parent=5 // pred_check
      %p168 = pneg %p167
    $region22: #{a_call__.3} parent=5 // pred_check_branch
      %170 = sbr.rel (%p168) target = $region24
    $region23: #{a_call__.3} parent=5 // pred_region
      // Predicated region
      $region25: #{a_call__.3} parent=23 // pred_check
        %p171 = pneg %p42
      $region26: #{a_call__.3} parent=23 // pred_check_branch
        %173 = sbr.rel (%p171) target = $region28
      $region27: #{a_call__.3} parent=23 // pred_region
        %p174 = scmp.lt.s32.totalorder %s17, 1
        %s175 = scalar_select %p174, %s17, 1
        %s176 = smul.addr %s175, 20
        %s177 = smul.addr %s176, 4
        %s178 = scalar_lea.vmem %s0, %s177
      $region28: #{a_call__.3} parent=23 // pred_fallthru
        _
      // Predicated region
      $region29: #{a_call__.3} parent=23 // pred_check
        %p179 = pneg %p91
      $region30: #{a_call__.3} parent=23 // pred_check_branch
        %181 = sbr.rel (%p179) target = $region32
      $region31: #{a_call__.3} parent=23 // pred_region
        %s182 = smul.u32 4, %s18
        %p183 = scmp.lt.s32.totalorder %s17, 1
        %s184 = scalar_select %p183, %s17, 1
        %p185 = scmp.lt.s32.totalorder %s182, 7
        %s186 = scalar_select %p185, %s182, 7
        %s187 = smul.addr %s184, 8
        %s188 = sadd.s32 %s186, %s187
        %s189 = smul.addr %s188, 4
        %s190 = scalar_lea.vmem %s2, %s189
        %s191 = smul.u32 4, %s18
      $region32: #{a_call__.3} parent=23 // pred_fallthru
        _
    $region24: #{a_call__.3} parent=5 // pred_fallthru
      _
    %p192 = scmp.le.s32.totalorder 1, %s10
    %p193 = scmp.lt.s32.totalorder %s10, 5
    %p194 = pnand %p192, %p193
    %p195 = pneg %p194
    // Predicated region
    $region33: #{a_call__.3} parent=5 // pred_check
      _
    $region34: #{a_call__.3} parent=5 // pred_check_branch
      %197 = sbr.rel (%p194) target = $region36
    $region35: #{a_call__.3} parent=5 // pred_region
      %s198 = ssub.s32 %s10, 1
      %p199 = scmp.lt.s32.totalorder %s19, 1
      %s200 = scalar_select %p199, %s19, 1
      %s201 = smul.addr %s200, 20
      %s202 = smul.addr %s201, 4
      %s203 = scalar_lea.vmem %s0, %s202
      %p204 = pneg %p48
      %p205 = pneg %p45
      %p206 = pneg %p69
      %p207 = pneg %p66
      %s208 = smul.u32 4, %s20
      %p209 = scmp.lt.s32.totalorder %s19, 1
      %s210 = scalar_select %p209, %s19, 1
      %p211 = scmp.lt.s32.totalorder %s208, 7
      %s212 = scalar_select %p211, %s208, 7
      %s213 = smul.addr %s210, 8
      %s214 = sadd.s32 %s212, %s213
      %s215 = smul.addr %s214, 4
      %s216 = scalar_lea.vmem %s2, %s215
      %p217 = pneg %p97
      %p218 = pneg %p94
      %p219 = pneg %p118
      %p220 = pneg %p115
      %p221 = pneg %p146
      %p222 = pneg %p143
      %s223 = smul.u32 4, %s20
      %p224 = scmp.lt.s32.totalorder %s19, 1
      %s225 = scalar_select %p224, %s19, 1
      %p226 = scmp.lt.s32.totalorder %s223, 7
      %s227 = scalar_select %p226, %s223, 7
      %s228 = smul.addr %s225, 8
      %s229 = sadd.s32 %s227, %s228
      %s230 = smul.addr %s229, 8
      %s231 = scalar_lea.vmem %s4, %s230
      %p232 = scmp.lt.s32.totalorder %s19, 1
      %s233 = scalar_select %p232, %s19, 1
      %s234 = smul.addr %s233, 20
      %s235 = smul.addr %s234, 4
      %s236 = scalar_lea.vmem %s0, %s235
      %s237 = smul.u32 4, %s20
      %p238 = scmp.lt.s32.totalorder %s19, 1
      %s239 = scalar_select %p238, %s19, 1
      %p240 = scmp.lt.s32.totalorder %s237, 7
      %s241 = scalar_select %p240, %s237, 7
      %s242 = smul.addr %s239, 8
      %s243 = sadd.s32 %s241, %s242
      %s244 = smul.addr %s243, 4
      %s245 = scalar_lea.vmem %s2, %s244
      %s246 = smul.u32 4, %s20
      %s247 = smul.u32 4, %s20
      %p248 = scmp.lt.s32.totalorder %s19, 1
      %s249 = scalar_select %p248, %s19, 1
      %p250 = scmp.lt.s32.totalorder %s247, 7
      %s251 = scalar_select %p250, %s247, 7
      %s252 = smul.addr %s249, 8
      %s253 = sadd.s32 %s251, %s252
      %s254 = smul.addr %s253, 8
      %s255 = scalar_lea.vmem %s4, %s254
      %s256 = smul.u32 4, %s20
      %s258 = smul.u32 %s20, 4
      %s259 = smul.u32 %s258, 2
      %s260 = smul.addr %s259, 4
      %s261 = scalar_lea.vmem %s236, %s260
      %v262 = vld [vmem:[%s261] sm:$0xf]
      %v263 = vld [vmem:[%s261 + $0x8] sm:$0xf]
      %v264 = vld [vmem:[%s261 + $0x10] sm:$0xf]
      %v265 = vld [vmem:[%s261 + $0x18] sm:$0xf]
      %v266 = vld [vmem:[%s1] sm:$0xf]
      %v267 = vld [vmem:[%s1 + $0x4] sm:$0xf]
      %v268 = vld [vmem:[%s1 + $0x8] sm:$0xf]
      %v269 = vld [vmem:[%s1 + $0xc] sm:$0xf]
      %v270 = vld [vmem:[%s1 + $0x10] sm:$0xf]
      %v271 = vld [vmem:[%s1 + $0x14] sm:$0xf]
      %v272 = vld [vmem:[%s1 + $0x18] sm:$0xf]
      %v273 = vld [vmem:[%s1 + $0x1c] sm:$0xf]
      %v274 = vld [vmem:[%s1 + $0x20] sm:$0xf]
      %v275 = vld [vmem:[%s1 + $0x24] sm:$0xf]
      %v276 = vld [vmem:[%s1 + $0x28] sm:$0xf]
      %v277 = vld [vmem:[%s1 + $0x2c] sm:$0xf]
      %v278 = vld [vmem:[%s1 + $0x30] sm:$0xf]
      %v279 = vld [vmem:[%s1 + $0x34] sm:$0xf]
      %v280 = vld [vmem:[%s1 + $0x38] sm:$0xf]
      %v281 = vld [vmem:[%s1 + $0x3c] sm:$0xf]
      %v282 = vld [vmem:[%s261 + $0x4] sm:$0x1]
      %v283 = vld [vmem:[%s261 + $0xc] sm:$0x1]
      %v284 = vld [vmem:[%s261 + $0x14] sm:$0x1]
      %v285 = vld [vmem:[%s261 + $0x1c] sm:$0x1]
      %vm286 = vsmask.f32 3328
      %vm287 = vsmask.f32 7440
      %vm288 = vmor %vm286, %vm287
      %v290 = vshrl.u32 %v262, 16
      %v292 = vrot.slane %v290, 4
      %v293 = vshll.u32 %v262, 16
      %v295 = vrot.slane %v293, 5
      %v296 = vor.u32 %v292, %v295
      %v297 = vrot.slane %v296, 4
      %v299 = vshll.u32 %v282, 16
      %v301 = vrot.slane %v299, 5
      %v302 = vsel %vm288, %v297, %v301
      %v304 = vshrl.u32 %v263, 16
      %v306 = vrot.slane %v304, 4
      %v307 = vshll.u32 %v263, 16
      %v309 = vrot.slane %v307, 5
      %v310 = vor.u32 %v306, %v309
      %v311 = vrot.slane %v310, 4
      %v313 = vshll.u32 %v283, 16
      %v315 = vrot.slane %v313, 5
      %v316 = vsel %vm288, %v311, %v315
      %v318 = vshrl.u32 %v264, 16
      %v320 = vrot.slane %v318, 4
      %v321 = vshll.u32 %v264, 16
      %v323 = vrot.slane %v321, 5
      %v324 = vor.u32 %v320, %v323
      %v325 = vrot.slane %v324, 4
      %v327 = vshll.u32 %v284, 16
      %v329 = vrot.slane %v327, 5
      %v330 = vsel %vm288, %v325, %v329
      %v332 = vshrl.u32 %v265, 16
      %v334 = vrot.slane %v332, 4
      %v335 = vshll.u32 %v265, 16
      %v337 = vrot.slane %v335, 5
      %v338 = vor.u32 %v334, %v337
      %v339 = vrot.slane %v338, 4
      %v341 = vshll.u32 %v285, 16
      %v343 = vrot.slane %v341, 5
      %v344 = vsel %vm288, %v339, %v343
      %s345 = scalar_lea.vmem %s1, 64
      %v346 = vld [vmem:[%s345] sm:$0xf]
      %v347 = vld [vmem:[%s345 + $0x4] sm:$0xf]
      %v348 = vld [vmem:[%s345 + $0x8] sm:$0xf]
      %v349 = vld [vmem:[%s345 + $0xc] sm:$0xf]
      %v350 = vld [vmem:[%s345 + $0x10] sm:$0xf]
      %v351 = vld [vmem:[%s345 + $0x14] sm:$0xf]
      %v352 = vld [vmem:[%s345 + $0x18] sm:$0xf]
      %v353 = vld [vmem:[%s345 + $0x1c] sm:$0xf]
      %v354 = vld [vmem:[%s345 + $0x20] sm:$0xf]
      %v355 = vld [vmem:[%s345 + $0x24] sm:$0xf]
      %v356 = vld [vmem:[%s345 + $0x28] sm:$0xf]
      %v357 = vld [vmem:[%s345 + $0x2c] sm:$0xf]
      %v358 = vld [vmem:[%s345 + $0x30] sm:$0xf]
      %v359 = vld [vmem:[%s345 + $0x34] sm:$0xf]
      %v360 = vld [vmem:[%s345 + $0x38] sm:$0xf]
      %v361 = vld [vmem:[%s345 + $0x3c] sm:$0xf]
      %v362 = vunpack.c.l.b16 %v302
      %v363 = vunpack.c.l.b16 %v316
      %v364 = vunpack.c.l.b16 %v330
      %v365 = vunpack.c.l.b16 %v344
      %v366 = vpack.c.b16 %v363, %v362
      %v367 = vpack.c.b16 %v365, %v364
      %v386 = vunpack.c.l.b16 %v346
      %v387 = vunpack.c.l.b16 %v347
      %v388 = vunpack.c.l.b16 %v348
      %v389 = vunpack.c.l.b16 %v349
      %v390 = vunpack.c.l.b16 %v350
      %v391 = vunpack.c.l.b16 %v351
      %v392 = vunpack.c.l.b16 %v352
      %v393 = vunpack.c.l.b16 %v353
      %v394 = vunpack.c.l.b16 %v354
      %v395 = vunpack.c.l.b16 %v355
      %v396 = vunpack.c.l.b16 %v356
      %v397 = vunpack.c.l.b16 %v357
      %v398 = vunpack.c.l.b16 %v358
      %v399 = vunpack.c.l.b16 %v359
      %v400 = vunpack.c.l.b16 %v360
      %v401 = vunpack.c.l.b16 %v361
      %v402 = vpack.c.b16 %v387, %v386
      %v403 = vpack.c.b16 %v389, %v388
      %v404 = vpack.c.b16 %v391, %v390
      %v405 = vpack.c.b16 %v393, %v392
      %v406 = vpack.c.b16 %v395, %v394
      %v407 = vpack.c.b16 %v397, %v396
      %v408 = vpack.c.b16 %v399, %v398
      %v409 = vpack.c.b16 %v401, %v400
      %418 = vmatprep.subr.bf16.mxu0 0
      %419 = vmatpush1.bf16.msra.mxu0 %v409
      %420 = vmatprep.subr.bf16.mxu0 0
      %421 = vmatpush1.bf16.msra.mxu0 %v408
      %422 = vmatprep.subr.bf16.mxu0 0
      %423 = vmatpush1.bf16.msra.mxu0 %v407
      %424 = vmatprep.subr.bf16.mxu0 0
      %425 = vmatpush1.bf16.msra.mxu0 %v406
      %426 = vmatprep.subr.bf16.mxu0 0
      %427 = vmatpush1.bf16.msra.mxu0 %v405
      %428 = vmatprep.subr.bf16.mxu0 0
      %429 = vmatpush1.bf16.msra.mxu0 %v404
      %430 = vmatprep.subr.bf16.mxu0 0
      %431 = vmatpush1.bf16.msra.mxu0 %v403
      %432 = vmatprep.subr.bf16.mxu0 0
      %433 = vmatpush1.bf16.msra.mxu0 %v402
      %434 = vmatprep.subr.bf16.mxu0 0
      %435 = vmatpush2.bf16.msra.mxu0 0
      %436 = vmatprep.subr.bf16.mxu0 0
      %437 = vmatpush2.bf16.msra.mxu0 0
      %438 = vmatprep.subr.bf16.mxu0 0
      %439 = vmatpush2.bf16.msra.mxu0 0
      %440 = vmatprep.subr.bf16.mxu0 0
      %441 = vmatpush2.bf16.msra.mxu0 0
      %442 = vmatprep.subr.bf16.mxu0 0
      %443 = vmatpush2.bf16.msra.mxu0 0
      %444 = vmatprep.subr.bf16.mxu0 0
      %445 = vmatpush2.bf16.msra.mxu0 0
      %446 = vmatprep.subr.bf16.mxu0 0
      %447 = vmatpush2.bf16.msra.mxu0 0
      %448 = vmatprep.subr.bf16.mxu0 0
      %449 = vmatpush2.bf16.msra.mxu0 0
      %450 = vmatprep.mubr.bf16.mxu0 0
      %451 = vmatmul.mubr.bf16.gmra.mxu0 %v366
      %v452 = vpop.f32.mrf.mxu0
      %v453 = vadd.f32 0.0, %v452
      %v454 = vpop.f32.mrf.mxu0
      %v455 = vpop.f32.mrf.mxu0
      %v456 = vadd.f32 0.0, %v455
      %v457 = vpop.f32.mrf.mxu0
      %458 = vmatprep.mubr.bf16.mxu0 0
      %459 = vmatmul.mubr.bf16.gmra.mxu0 %v367
      %v460 = vpop.f32.mrf.mxu0
      %v461 = vadd.f32 0.0, %v460
      %v462 = vpop.f32.mrf.mxu0
      %v463 = vpop.f32.mrf.mxu0
      %v464 = vadd.f32 0.0, %v463
      %v465 = vpop.f32.mrf.mxu0
      %466 = vdwg.mxu0
      %v471 = vunpack.c.l.b16 %v262
      %v472 = vunpack.c.l.b16 %v263
      %v473 = vunpack.c.l.b16 %v264
      %v474 = vunpack.c.l.b16 %v265
      %v475 = vpack.c.b16 %v472, %v471
      %v476 = vpack.c.b16 %v474, %v473
      %v495 = vunpack.c.l.b16 %v266
      %v496 = vunpack.c.l.b16 %v267
      %v497 = vunpack.c.l.b16 %v268
      %v498 = vunpack.c.l.b16 %v269
      %v499 = vunpack.c.l.b16 %v270
      %v500 = vunpack.c.l.b16 %v271
      %v501 = vunpack.c.l.b16 %v272
      %v502 = vunpack.c.l.b16 %v273
      %v503 = vunpack.c.l.b16 %v274
      %v504 = vunpack.c.l.b16 %v275
      %v505 = vunpack.c.l.b16 %v276
      %v506 = vunpack.c.l.b16 %v277
      %v507 = vunpack.c.l.b16 %v278
      %v508 = vunpack.c.l.b16 %v279
      %v509 = vunpack.c.l.b16 %v280
      %v510 = vunpack.c.l.b16 %v281
      %v511 = vpack.c.b16 %v496, %v495
      %v512 = vpack.c.b16 %v498, %v497
      %v513 = vpack.c.b16 %v500, %v499
      %v514 = vpack.c.b16 %v502, %v501
      %v515 = vpack.c.b16 %v504, %v503
      %v516 = vpack.c.b16 %v506, %v505
      %v517 = vpack.c.b16 %v508, %v507
      %v518 = vpack.c.b16 %v510, %v509
      %527 = vmatprep.subr.bf16.mxu0 0
      %528 = vmatpush1.bf16.msra.mxu0 %v518
      %529 = vmatprep.subr.bf16.mxu0 0
      %530 = vmatpush1.bf16.msra.mxu0 %v517
      %531 = vmatprep.subr.bf16.mxu0 0
      %532 = vmatpush1.bf16.msra.mxu0 %v516
      %533 = vmatprep.subr.bf16.mxu0 0
      %534 = vmatpush1.bf16.msra.mxu0 %v515
      %535 = vmatprep.subr.bf16.mxu0 0
      %536 = vmatpush1.bf16.msra.mxu0 %v514
      %537 = vmatprep.subr.bf16.mxu0 0
      %538 = vmatpush1.bf16.msra.mxu0 %v513
      %539 = vmatprep.subr.bf16.mxu0 0
      %540 = vmatpush1.bf16.msra.mxu0 %v512
      %541 = vmatprep.subr.bf16.mxu0 0
      %542 = vmatpush1.bf16.msra.mxu0 %v511
      %543 = vmatprep.subr.bf16.mxu0 0
      %544 = vmatpush2.bf16.msra.mxu0 0
      %545 = vmatprep.subr.bf16.mxu0 0
      %546 = vmatpush2.bf16.msra.mxu0 0
      %547 = vmatprep.subr.bf16.mxu0 0
      %548 = vmatpush2.bf16.msra.mxu0 0
      %549 = vmatprep.subr.bf16.mxu0 0
      %550 = vmatpush2.bf16.msra.mxu0 0
      %551 = vmatprep.subr.bf16.mxu0 0
      %552 = vmatpush2.bf16.msra.mxu0 0
      %553 = vmatprep.subr.bf16.mxu0 0
      %554 = vmatpush2.bf16.msra.mxu0 0
      %555 = vmatprep.subr.bf16.mxu0 0
      %556 = vmatpush2.bf16.msra.mxu0 0
      %557 = vmatprep.subr.bf16.mxu0 0
      %558 = vmatpush2.bf16.msra.mxu0 0
      %559 = vmatprep.mubr.bf16.mxu0 0
      %560 = vmatmul.mubr.bf16.gmra.mxu0 %v475
      %v561 = vpop.f32.mrf.mxu0
      %v562 = vadd.f32 %v453, %v561
      %v563 = vpop.f32.mrf.mxu0
      %v564 = vpop.f32.mrf.mxu0
      %v565 = vadd.f32 %v456, %v564
      %v566 = vpop.f32.mrf.mxu0
      %567 = vmatprep.mubr.bf16.mxu0 0
      %568 = vmatmul.mubr.bf16.gmra.mxu0 %v476
      %v569 = vpop.f32.mrf.mxu0
      %v570 = vadd.f32 %v461, %v569
      %v571 = vpop.f32.mrf.mxu0
      %v572 = vpop.f32.mrf.mxu0
      %v573 = vadd.f32 %v464, %v572
      %v574 = vpop.f32.mrf.mxu0
      %575 = vdwg.mxu0
      %v576 = vld [vmem:[%s261] sm:$0xe]
      %v577 = vld [vmem:[%s261 + $0x8] sm:$0xe]
      %v578 = vld [vmem:[%s261 + $0x10] sm:$0xe]
      %v579 = vld [vmem:[%s261 + $0x18] sm:$0xe]
      %vm588 = vcmask 1042432
      %vm589 = vcmask 1046532
      %vm590 = vmor %vm588, %vm589
      %v591 = vrot.slane %v576, 5
      %v592 = vrot.slane %v591, 4
      %v593 = vrot.slane %v282, 5
      %v594 = vsel %vm590, %v592, %v593
      %v595 = vrot.slane %v577, 5
      %v596 = vrot.slane %v595, 4
      %v597 = vrot.slane %v283, 5
      %v598 = vsel %vm590, %v596, %v597
      %v599 = vrot.slane %v578, 5
      %v600 = vrot.slane %v599, 4
      %v601 = vrot.slane %v284, 5
      %v602 = vsel %vm590, %v600, %v601
      %v603 = vrot.slane %v579, 5
      %v604 = vrot.slane %v603, 4
      %v605 = vrot.slane %v285, 5
      %v606 = vsel %vm590, %v604, %v605
      %s607 = scalar_lea.vmem %s1, 128
      %v608 = vld [vmem:[%s607] sm:$0xf]
      %v609 = vld [vmem:[%s607 + $0x4] sm:$0xf]
      %v610 = vld [vmem:[%s607 + $0x8] sm:$0xf]
      %v611 = vld [vmem:[%s607 + $0xc] sm:$0xf]
      %v612 = vld [vmem:[%s607 + $0x10] sm:$0xf]
      %v613 = vld [vmem:[%s607 + $0x14] sm:$0xf]
      %v614 = vld [vmem:[%s607 + $0x18] sm:$0xf]
      %v615 = vld [vmem:[%s607 + $0x1c] sm:$0xf]
      %v616 = vld [vmem:[%s607 + $0x20] sm:$0xf]
      %v617 = vld [vmem:[%s607 + $0x24] sm:$0xf]
      %v618 = vld [vmem:[%s607 + $0x28] sm:$0xf]
      %v619 = vld [vmem:[%s607 + $0x2c] sm:$0xf]
      %v620 = vld [vmem:[%s607 + $0x30] sm:$0xf]
      %v621 = vld [vmem:[%s607 + $0x34] sm:$0xf]
      %v622 = vld [vmem:[%s607 + $0x38] sm:$0xf]
      %v623 = vld [vmem:[%s607 + $0x3c] sm:$0xf]
      %v624 = vunpack.c.l.b16 %v594
      %v625 = vunpack.c.l.b16 %v598
      %v626 = vunpack.c.l.b16 %v602
      %v627 = vunpack.c.l.b16 %v606
      %v628 = vpack.c.b16 %v625, %v624
      %v629 = vpack.c.b16 %v627, %v626
      %v648 = vunpack.c.l.b16 %v608
      %v649 = vunpack.c.l.b16 %v609
      %v650 = vunpack.c.l.b16 %v610
      %v651 = vunpack.c.l.b16 %v611
      %v652 = vunpack.c.l.b16 %v612
      %v653 = vunpack.c.l.b16 %v613
      %v654 = vunpack.c.l.b16 %v614
      %v655 = vunpack.c.l.b16 %v615
      %v656 = vunpack.c.l.b16 %v616
      %v657 = vunpack.c.l.b16 %v617
      %v658 = vunpack.c.l.b16 %v618
      %v659 = vunpack.c.l.b16 %v619
      %v660 = vunpack.c.l.b16 %v620
      %v661 = vunpack.c.l.b16 %v621
      %v662 = vunpack.c.l.b16 %v622
      %v663 = vunpack.c.l.b16 %v623
      %v664 = vpack.c.b16 %v649, %v648
      %v665 = vpack.c.b16 %v651, %v650
      %v666 = vpack.c.b16 %v653, %v652
      %v667 = vpack.c.b16 %v655, %v654
      %v668 = vpack.c.b16 %v657, %v656
      %v669 = vpack.c.b16 %v659, %v658
      %v670 = vpack.c.b16 %v661, %v660
      %v671 = vpack.c.b16 %v663, %v662
      %680 = vmatprep.subr.bf16.mxu0 0
      %681 = vmatpush1.bf16.msra.mxu0 %v671
      %682 = vmatprep.subr.bf16.mxu0 0
      %683 = vmatpush1.bf16.msra.mxu0 %v670
      %684 = vmatprep.subr.bf16.mxu0 0
      %685 = vmatpush1.bf16.msra.mxu0 %v669
      %686 = vmatprep.subr.bf16.mxu0 0
      %687 = vmatpush1.bf16.msra.mxu0 %v668
      %688 = vmatprep.subr.bf16.mxu0 0
      %689 = vmatpush1.bf16.msra.mxu0 %v667
      %690 = vmatprep.subr.bf16.mxu0 0
      %691 = vmatpush1.bf16.msra.mxu0 %v666
      %692 = vmatprep.subr.bf16.mxu0 0
      %693 = vmatpush1.bf16.msra.mxu0 %v665
      %694 = vmatprep.subr.bf16.mxu0 0
      %695 = vmatpush1.bf16.msra.mxu0 %v664
      %696 = vmatprep.subr.bf16.mxu0 0
      %697 = vmatpush2.bf16.msra.mxu0 0
      %698 = vmatprep.subr.bf16.mxu0 0
      %699 = vmatpush2.bf16.msra.mxu0 0
      %700 = vmatprep.subr.bf16.mxu0 0
      %701 = vmatpush2.bf16.msra.mxu0 0
      %702 = vmatprep.subr.bf16.mxu0 0
      %703 = vmatpush2.bf16.msra.mxu0 0
      %704 = vmatprep.subr.bf16.mxu0 0
      %705 = vmatpush2.bf16.msra.mxu0 0
      %706 = vmatprep.subr.bf16.mxu0 0
      %707 = vmatpush2.bf16.msra.mxu0 0
      %708 = vmatprep.subr.bf16.mxu0 0
      %709 = vmatpush2.bf16.msra.mxu0 0
      %710 = vmatprep.subr.bf16.mxu0 0
      %711 = vmatpush2.bf16.msra.mxu0 0
      %712 = vmatprep.mubr.bf16.mxu0 0
      %713 = vmatmul.mubr.bf16.gmra.mxu0 %v628
      %v714 = vpop.f32.mrf.mxu0
      %v715 = vadd.f32 0.0, %v714
      %v716 = vpop.f32.mrf.mxu0
      %v717 = vpop.f32.mrf.mxu0
      %v718 = vadd.f32 0.0, %v717
      %v719 = vpop.f32.mrf.mxu0
      %720 = vmatprep.mubr.bf16.mxu0 0
      %721 = vmatmul.mubr.bf16.gmra.mxu0 %v629
      %v722 = vpop.f32.mrf.mxu0
      %v723 = vadd.f32 0.0, %v722
      %v724 = vpop.f32.mrf.mxu0
      %v725 = vpop.f32.mrf.mxu0
      %v726 = vadd.f32 0.0, %v725
      %v727 = vpop.f32.mrf.mxu0
      %728 = vdwg.mxu0
      %v729 = vadd.f32 %v562, %v715
      %v730 = vadd.f32 %v565, %v718
      %v731 = vadd.f32 %v570, %v723
      %v732 = vadd.f32 %v573, %v726
      %s733 = sadd.s32 %s258, 1
      %s734 = smul.u32 %s733, 2
      %s735 = smul.addr %s734, 4
      %s736 = scalar_lea.vmem %s236, %s735
      %v737 = vld [vmem:[%s736] sm:$0xf]
      %v738 = vld [vmem:[%s736 + $0x8] sm:$0xf]
      %v739 = vld [vmem:[%s736 + $0x10] sm:$0xf]
      %v740 = vld [vmem:[%s736 + $0x18] sm:$0xf]
      %s741 = scalar_lea.vmem %s1, 192
      %v742 = vld [vmem:[%s741] sm:$0xf]
      %v743 = vld [vmem:[%s741 + $0x4] sm:$0xf]
      %v744 = vld [vmem:[%s741 + $0x8] sm:$0xf]
      %v745 = vld [vmem:[%s741 + $0xc] sm:$0xf]
      %v746 = vld [vmem:[%s741 + $0x10] sm:$0xf]
      %v747 = vld [vmem:[%s741 + $0x14] sm:$0xf]
      %v748 = vld [vmem:[%s741 + $0x18] sm:$0xf]
      %v749 = vld [vmem:[%s741 + $0x1c] sm:$0xf]
      %v750 = vld [vmem:[%s741 + $0x20] sm:$0xf]
      %v751 = vld [vmem:[%s741 + $0x24] sm:$0xf]
      %v752 = vld [vmem:[%s741 + $0x28] sm:$0xf]
      %v753 = vld [vmem:[%s741 + $0x2c] sm:$0xf]
      %v754 = vld [vmem:[%s741 + $0x30] sm:$0xf]
      %v755 = vld [vmem:[%s741 + $0x34] sm:$0xf]
      %v756 = vld [vmem:[%s741 + $0x38] sm:$0xf]
      %v757 = vld [vmem:[%s741 + $0x3c] sm:$0xf]
      %v762 = vunpack.c.l.b16 %v737
      %v763 = vunpack.c.l.b16 %v738
      %v764 = vunpack.c.l.b16 %v739
      %v765 = vunpack.c.l.b16 %v740
      %v766 = vpack.c.b16 %v763, %v762
      %v767 = vpack.c.b16 %v765, %v764
      %v786 = vunpack.c.l.b16 %v742
      %v787 = vunpack.c.l.b16 %v743
      %v788 = vunpack.c.l.b16 %v744
      %v789 = vunpack.c.l.b16 %v745
      %v790 = vunpack.c.l.b16 %v746
      %v791 = vunpack.c.l.b16 %v747
      %v792 = vunpack.c.l.b16 %v748
      %v793 = vunpack.c.l.b16 %v749
      %v794 = vunpack.c.l.b16 %v750
      %v795 = vunpack.c.l.b16 %v751
      %v796 = vunpack.c.l.b16 %v752
      %v797 = vunpack.c.l.b16 %v753
      %v798 = vunpack.c.l.b16 %v754
      %v799 = vunpack.c.l.b16 %v755
      %v800 = vunpack.c.l.b16 %v756
      %v801 = vunpack.c.l.b16 %v757
      %v802 = vpack.c.b16 %v787, %v786
      %v803 = vpack.c.b16 %v789, %v788
      %v804 = vpack.c.b16 %v791, %v790
      %v805 = vpack.c.b16 %v793, %v792
      %v806 = vpack.c.b16 %v795, %v794
      %v807 = vpack.c.b16 %v797, %v796
      %v808 = vpack.c.b16 %v799, %v798
      %v809 = vpack.c.b16 %v801, %v800
      %818 = vmatprep.subr.bf16.mxu0 0
      %819 = vmatpush1.bf16.msra.mxu0 %v809
      %820 = vmatprep.subr.bf16.mxu0 0
      %821 = vmatpush1.bf16.msra.mxu0 %v808
      %822 = vmatprep.subr.bf16.mxu0 0
      %823 = vmatpush1.bf16.msra.mxu0 %v807
      %824 = vmatprep.subr.bf16.mxu0 0
      %825 = vmatpush1.bf16.msra.mxu0 %v806
      %826 = vmatprep.subr.bf16.mxu0 0
      %827 = vmatpush1.bf16.msra.mxu0 %v805
      %828 = vmatprep.subr.bf16.mxu0 0
      %829 = vmatpush1.bf16.msra.mxu0 %v804
      %830 = vmatprep.subr.bf16.mxu0 0
      %831 = vmatpush1.bf16.msra.mxu0 %v803
      %832 = vmatprep.subr.bf16.mxu0 0
      %833 = vmatpush1.bf16.msra.mxu0 %v802
      %834 = vmatprep.subr.bf16.mxu0 0
      %835 = vmatpush2.bf16.msra.mxu0 0
      %836 = vmatprep.subr.bf16.mxu0 0
      %837 = vmatpush2.bf16.msra.mxu0 0
      %838 = vmatprep.subr.bf16.mxu0 0
      %839 = vmatpush2.bf16.msra.mxu0 0
      %840 = vmatprep.subr.bf16.mxu0 0
      %841 = vmatpush2.bf16.msra.mxu0 0
      %842 = vmatprep.subr.bf16.mxu0 0
      %843 = vmatpush2.bf16.msra.mxu0 0
      %844 = vmatprep.subr.bf16.mxu0 0
      %845 = vmatpush2.bf16.msra.mxu0 0
      %846 = vmatprep.subr.bf16.mxu0 0
      %847 = vmatpush2.bf16.msra.mxu0 0
      %848 = vmatprep.subr.bf16.mxu0 0
      %849 = vmatpush2.bf16.msra.mxu0 0
      %850 = vmatprep.mubr.bf16.mxu0 0
      %851 = vmatmul.mubr.bf16.gmra.mxu0 %v766
      %v852 = vpop.f32.mrf.mxu0
      %v853 = vadd.f32 0.0, %v852
      %v854 = vpop.f32.mrf.mxu0
      %v855 = vpop.f32.mrf.mxu0
      %v856 = vadd.f32 0.0, %v855
      %v857 = vpop.f32.mrf.mxu0
      %858 = vmatprep.mubr.bf16.mxu0 0
      %859 = vmatmul.mubr.bf16.gmra.mxu0 %v767
      %v860 = vpop.f32.mrf.mxu0
      %v861 = vadd.f32 0.0, %v860
      %v862 = vpop.f32.mrf.mxu0
      %v863 = vpop.f32.mrf.mxu0
      %v864 = vadd.f32 0.0, %v863
      %v865 = vpop.f32.mrf.mxu0
      %866 = vdwg.mxu0
      %v867 = vadd.f32 %v729, %v853
      %v868 = vadd.f32 %v730, %v856
      %v869 = vadd.f32 %v731, %v861
      %v870 = vadd.f32 %v732, %v864
      %v871 = vld [vmem:[%s736] sm:$0xf]
      %v872 = vld [vmem:[%s736 + $0x4] sm:$0x1]
      %v873 = vld [vmem:[%s736 + $0x8] sm:$0xf]
      %v874 = vld [vmem:[%s736 + $0xc] sm:$0x1]
      %v875 = vld [vmem:[%s736 + $0x10] sm:$0xf]
      %v876 = vld [vmem:[%s736 + $0x14] sm:$0x1]
      %v877 = vld [vmem:[%s736 + $0x18] sm:$0xf]
      %v878 = vld [vmem:[%s736 + $0x1c] sm:$0x1]
      %v880 = vshrl.u32 %v871, 16
      %v882 = vrot.slane %v880, 4
      %v883 = vshll.u32 %v871, 16
      %v885 = vrot.slane %v883, 5
      %v886 = vor.u32 %v882, %v885
      %v887 = vrot.slane %v886, 4
      %v889 = vshll.u32 %v872, 16
      %v891 = vrot.slane %v889, 5
      %v892 = vsel %vm288, %v887, %v891
      %v894 = vshrl.u32 %v873, 16
      %v896 = vrot.slane %v894, 4
      %v897 = vshll.u32 %v873, 16
      %v899 = vrot.slane %v897, 5
      %v900 = vor.u32 %v896, %v899
      %v901 = vrot.slane %v900, 4
      %v903 = vshll.u32 %v874, 16
      %v905 = vrot.slane %v903, 5
      %v906 = vsel %vm288, %v901, %v905
      %v908 = vshrl.u32 %v875, 16
      %v910 = vrot.slane %v908, 4
      %v911 = vshll.u32 %v875, 16
      %v913 = vrot.slane %v911, 5
      %v914 = vor.u32 %v910, %v913
      %v915 = vrot.slane %v914, 4
      %v917 = vshll.u32 %v876, 16
      %v919 = vrot.slane %v917, 5
      %v920 = vsel %vm288, %v915, %v919
      %v922 = vshrl.u32 %v877, 16
      %v924 = vrot.slane %v922, 4
      %v925 = vshll.u32 %v877, 16
      %v927 = vrot.slane %v925, 5
      %v928 = vor.u32 %v924, %v927
      %v929 = vrot.slane %v928, 4
      %v931 = vshll.u32 %v878, 16
      %v933 = vrot.slane %v931, 5
      %v934 = vsel %vm288, %v929, %v933
      %s935 = scalar_lea.vmem %s1, 256
      %v936 = vld [vmem:[%s935] sm:$0xf]
      %v937 = vld [vmem:[%s935 + $0x4] sm:$0xf]
      %v938 = vld [vmem:[%s935 + $0x8] sm:$0xf]
      %v939 = vld [vmem:[%s935 + $0xc] sm:$0xf]
      %v940 = vld [vmem:[%s935 + $0x10] sm:$0xf]
      %v941 = vld [vmem:[%s935 + $0x14] sm:$0xf]
      %v942 = vld [vmem:[%s935 + $0x18] sm:$0xf]
      %v943 = vld [vmem:[%s935 + $0x1c] sm:$0xf]
      %v944 = vld [vmem:[%s935 + $0x20] sm:$0xf]
      %v945 = vld [vmem:[%s935 + $0x24] sm:$0xf]
      %v946 = vld [vmem:[%s935 + $0x28] sm:$0xf]
      %v947 = vld [vmem:[%s935 + $0x2c] sm:$0xf]
      %v948 = vld [vmem:[%s935 + $0x30] sm:$0xf]
      %v949 = vld [vmem:[%s935 + $0x34] sm:$0xf]
      %v950 = vld [vmem:[%s935 + $0x38] sm:$0xf]
      %v951 = vld [vmem:[%s935 + $0x3c] sm:$0xf]
      %v952 = vunpack.c.l.b16 %v892
      %v953 = vunpack.c.l.b16 %v906
      %v954 = vunpack.c.l.b16 %v920
      %v955 = vunpack.c.l.b16 %v934
      %v956 = vpack.c.b16 %v953, %v952
      %v957 = vpack.c.b16 %v955, %v954
      %v976 = vunpack.c.l.b16 %v936
      %v977 = vunpack.c.l.b16 %v937
      %v978 = vunpack.c.l.b16 %v938
      %v979 = vunpack.c.l.b16 %v939
      %v980 = vunpack.c.l.b16 %v940
      %v981 = vunpack.c.l.b16 %v941
      %v982 = vunpack.c.l.b16 %v942
      %v983 = vunpack.c.l.b16 %v943
      %v984 = vunpack.c.l.b16 %v944
      %v985 = vunpack.c.l.b16 %v945
      %v986 = vunpack.c.l.b16 %v946
      %v987 = vunpack.c.l.b16 %v947
      %v988 = vunpack.c.l.b16 %v948
      %v989 = vunpack.c.l.b16 %v949
      %v990 = vunpack.c.l.b16 %v950
      %v991 = vunpack.c.l.b16 %v951
      %v992 = vpack.c.b16 %v977, %v976
      %v993 = vpack.c.b16 %v979, %v978
      %v994 = vpack.c.b16 %v981, %v980
      %v995 = vpack.c.b16 %v983, %v982
      %v996 = vpack.c.b16 %v985, %v984
      %v997 = vpack.c.b16 %v987, %v986
      %v998 = vpack.c.b16 %v989, %v988
      %v999 = vpack.c.b16 %v991, %v990
      %1008 = vmatprep.subr.bf16.mxu0 0
      %1009 = vmatpush1.bf16.msra.mxu0 %v999
      %1010 = vmatprep.subr.bf16.mxu0 0
      %1011 = vmatpush1.bf16.msra.mxu0 %v998
      %1012 = vmatprep.subr.bf16.mxu0 0
      %1013 = vmatpush1.bf16.msra.mxu0 %v997
      %1014 = vmatprep.subr.bf16.mxu0 0
      %1015 = vmatpush1.bf16.msra.mxu0 %v996
      %1016 = vmatprep.subr.bf16.mxu0 0
      %1017 = vmatpush1.bf16.msra.mxu0 %v995
      %1018 = vmatprep.subr.bf16.mxu0 0
      %1019 = vmatpush1.bf16.msra.mxu0 %v994
      %1020 = vmatprep.subr.bf16.mxu0 0
      %1021 = vmatpush1.bf16.msra.mxu0 %v993
      %1022 = vmatprep.subr.bf16.mxu0 0
      %1023 = vmatpush1.bf16.msra.mxu0 %v992
      %1024 = vmatprep.subr.bf16.mxu0 0
      %1025 = vmatpush2.bf16.msra.mxu0 0
      %1026 = vmatprep.subr.bf16.mxu0 0
      %1027 = vmatpush2.bf16.msra.mxu0 0
      %1028 = vmatprep.subr.bf16.mxu0 0
      %1029 = vmatpush2.bf16.msra.mxu0 0
      %1030 = vmatprep.subr.bf16.mxu0 0
      %1031 = vmatpush2.bf16.msra.mxu0 0
      %1032 = vmatprep.subr.bf16.mxu0 0
      %1033 = vmatpush2.bf16.msra.mxu0 0
      %1034 = vmatprep.subr.bf16.mxu0 0
      %1035 = vmatpush2.bf16.msra.mxu0 0
      %1036 = vmatprep.subr.bf16.mxu0 0
      %1037 = vmatpush2.bf16.msra.mxu0 0
      %1038 = vmatprep.subr.bf16.mxu0 0
      %1039 = vmatpush2.bf16.msra.mxu0 0
      %1040 = vmatprep.mubr.bf16.mxu0 0
      %1041 = vmatmul.mubr.bf16.gmra.mxu0 %v956
      %v1042 = vpop.f32.mrf.mxu0
      %v1043 = vadd.f32 0.0, %v1042
      %v1044 = vpop.f32.mrf.mxu0
      %v1045 = vpop.f32.mrf.mxu0
      %v1046 = vadd.f32 0.0, %v1045
      %v1047 = vpop.f32.mrf.mxu0
      %1048 = vmatprep.mubr.bf16.mxu0 0
      %1049 = vmatmul.mubr.bf16.gmra.mxu0 %v957
      %v1050 = vpop.f32.mrf.mxu0
      %v1051 = vadd.f32 0.0, %v1050
      %v1052 = vpop.f32.mrf.mxu0
      %v1053 = vpop.f32.mrf.mxu0
      %v1054 = vadd.f32 0.0, %v1053
      %v1055 = vpop.f32.mrf.mxu0
      %1056 = vdwg.mxu0
      %v1057 = vadd.f32 %v867, %v1043
      %v1058 = vadd.f32 %v868, %v1046
      %v1059 = vadd.f32 %v869, %v1051
      %v1060 = vadd.f32 %v870, %v1054
      %v1061 = vld [vmem:[%s736] sm:$0xe]
      %v1062 = vld [vmem:[%s736 + $0x8] sm:$0xe]
      %v1063 = vld [vmem:[%s736 + $0x10] sm:$0xe]
      %v1064 = vld [vmem:[%s736 + $0x18] sm:$0xe]
      %v1073 = vrot.slane %v1061, 5
      %v1074 = vrot.slane %v1073, 4
      %v1075 = vrot.slane %v872, 5
      %v1076 = vsel %vm590, %v1074, %v1075
      %v1077 = vrot.slane %v1062, 5
      %v1078 = vrot.slane %v1077, 4
      %v1079 = vrot.slane %v874, 5
      %v1080 = vsel %vm590, %v1078, %v1079
      %v1081 = vrot.slane %v1063, 5
      %v1082 = vrot.slane %v1081, 4
      %v1083 = vrot.slane %v876, 5
      %v1084 = vsel %vm590, %v1082, %v1083
      %v1085 = vrot.slane %v1064, 5
      %v1086 = vrot.slane %v1085, 4
      %v1087 = vrot.slane %v878, 5
      %v1088 = vsel %vm590, %v1086, %v1087
      %s1089 = scalar_lea.vmem %s1, 320
      %v1090 = vld [vmem:[%s1089] sm:$0xf]
      %v1091 = vld [vmem:[%s1089 + $0x4] sm:$0xf]
      %v1092 = vld [vmem:[%s1089 + $0x8] sm:$0xf]
      %v1093 = vld [vmem:[%s1089 + $0xc] sm:$0xf]
      %v1094 = vld [vmem:[%s1089 + $0x10] sm:$0xf]
      %v1095 = vld [vmem:[%s1089 + $0x14] sm:$0xf]
      %v1096 = vld [vmem:[%s1089 + $0x18] sm:$0xf]
      %v1097 = vld [vmem:[%s1089 + $0x1c] sm:$0xf]
      %v1098 = vld [vmem:[%s1089 + $0x20] sm:$0xf]
      %v1099 = vld [vmem:[%s1089 + $0x24] sm:$0xf]
      %v1100 = vld [vmem:[%s1089 + $0x28] sm:$0xf]
      %v1101 = vld [vmem:[%s1089 + $0x2c] sm:$0xf]
      %v1102 = vld [vmem:[%s1089 + $0x30] sm:$0xf]
      %v1103 = vld [vmem:[%s1089 + $0x34] sm:$0xf]
      %v1104 = vld [vmem:[%s1089 + $0x38] sm:$0xf]
      %v1105 = vld [vmem:[%s1089 + $0x3c] sm:$0xf]
      %v1106 = vunpack.c.l.b16 %v1076
      %v1107 = vunpack.c.l.b16 %v1080
      %v1108 = vunpack.c.l.b16 %v1084
      %v1109 = vunpack.c.l.b16 %v1088
      %v1110 = vpack.c.b16 %v1107, %v1106
      %v1111 = vpack.c.b16 %v1109, %v1108
      %v1130 = vunpack.c.l.b16 %v1090
      %v1131 = vunpack.c.l.b16 %v1091
      %v1132 = vunpack.c.l.b16 %v1092
      %v1133 = vunpack.c.l.b16 %v1093
      %v1134 = vunpack.c.l.b16 %v1094
      %v1135 = vunpack.c.l.b16 %v1095
      %v1136 = vunpack.c.l.b16 %v1096
      %v1137 = vunpack.c.l.b16 %v1097
      %v1138 = vunpack.c.l.b16 %v1098
      %v1139 = vunpack.c.l.b16 %v1099
      %v1140 = vunpack.c.l.b16 %v1100
      %v1141 = vunpack.c.l.b16 %v1101
      %v1142 = vunpack.c.l.b16 %v1102
      %v1143 = vunpack.c.l.b16 %v1103
      %v1144 = vunpack.c.l.b16 %v1104
      %v1145 = vunpack.c.l.b16 %v1105
      %v1146 = vpack.c.b16 %v1131, %v1130
      %v1147 = vpack.c.b16 %v1133, %v1132
      %v1148 = vpack.c.b16 %v1135, %v1134
      %v1149 = vpack.c.b16 %v1137, %v1136
      %v1150 = vpack.c.b16 %v1139, %v1138
      %v1151 = vpack.c.b16 %v1141, %v1140
      %v1152 = vpack.c.b16 %v1143, %v1142
      %v1153 = vpack.c.b16 %v1145, %v1144
      %1162 = vmatprep.subr.bf16.mxu0 0
      %1163 = vmatpush1.bf16.msra.mxu0 %v1153
      %1164 = vmatprep.subr.bf16.mxu0 0
      %1165 = vmatpush1.bf16.msra.mxu0 %v1152
      %1166 = vmatprep.subr.bf16.mxu0 0
      %1167 = vmatpush1.bf16.msra.mxu0 %v1151
      %1168 = vmatprep.subr.bf16.mxu0 0
      %1169 = vmatpush1.bf16.msra.mxu0 %v1150
      %1170 = vmatprep.subr.bf16.mxu0 0
      %1171 = vmatpush1.bf16.msra.mxu0 %v1149
      %1172 = vmatprep.subr.bf16.mxu0 0
      %1173 = vmatpush1.bf16.msra.mxu0 %v1148
      %1174 = vmatprep.subr.bf16.mxu0 0
      %1175 = vmatpush1.bf16.msra.mxu0 %v1147
      %1176 = vmatprep.subr.bf16.mxu0 0
      %1177 = vmatpush1.bf16.msra.mxu0 %v1146
      %1178 = vmatprep.subr.bf16.mxu0 0
      %1179 = vmatpush2.bf16.msra.mxu0 0
      %1180 = vmatprep.subr.bf16.mxu0 0
      %1181 = vmatpush2.bf16.msra.mxu0 0
      %1182 = vmatprep.subr.bf16.mxu0 0
      %1183 = vmatpush2.bf16.msra.mxu0 0
      %1184 = vmatprep.subr.bf16.mxu0 0
      %1185 = vmatpush2.bf16.msra.mxu0 0
      %1186 = vmatprep.subr.bf16.mxu0 0
      %1187 = vmatpush2.bf16.msra.mxu0 0
      %1188 = vmatprep.subr.bf16.mxu0 0
      %1189 = vmatpush2.bf16.msra.mxu0 0
      %1190 = vmatprep.subr.bf16.mxu0 0
      %1191 = vmatpush2.bf16.msra.mxu0 0
      %1192 = vmatprep.subr.bf16.mxu0 0
      %1193 = vmatpush2.bf16.msra.mxu0 0
      %1194 = vmatprep.mubr.bf16.mxu0 0
      %1195 = vmatmul.mubr.bf16.gmra.mxu0 %v1110
      %v1196 = vpop.f32.mrf.mxu0
      %v1197 = vadd.f32 0.0, %v1196
      %v1198 = vpop.f32.mrf.mxu0
      %v1199 = vpop.f32.mrf.mxu0
      %v1200 = vadd.f32 0.0, %v1199
      %v1201 = vpop.f32.mrf.mxu0
      %1202 = vmatprep.mubr.bf16.mxu0 0
      %1203 = vmatmul.mubr.bf16.gmra.mxu0 %v1111
      %v1204 = vpop.f32.mrf.mxu0
      %v1205 = vadd.f32 0.0, %v1204
      %v1206 = vpop.f32.mrf.mxu0
      %v1207 = vpop.f32.mrf.mxu0
      %v1208 = vadd.f32 0.0, %v1207
      %v1209 = vpop.f32.mrf.mxu0
      %1210 = vdwg.mxu0
      %v1211 = vadd.f32 %v1057, %v1197
      %v1212 = vadd.f32 %v1058, %v1200
      %v1213 = vadd.f32 %v1059, %v1205
      %v1214 = vadd.f32 %v1060, %v1208
      %s1215 = sadd.s32 %s258, 2
      %s1216 = smul.u32 %s1215, 2
      %s1217 = smul.addr %s1216, 4
      %s1218 = scalar_lea.vmem %s236, %s1217
      %v1219 = vld [vmem:[%s1218] sm:$0xf]
      %v1220 = vld [vmem:[%s1218 + $0x8] sm:$0xf]
      %v1221 = vld [vmem:[%s1218 + $0x10] sm:$0xf]
      %v1222 = vld [vmem:[%s1218 + $0x18] sm:$0xf]
      %s1223 = scalar_lea.vmem %s1, 384
      %v1224 = vld [vmem:[%s1223] sm:$0xf]
      %v1225 = vld [vmem:[%s1223 + $0x4] sm:$0xf]
      %v1226 = vld [vmem:[%s1223 + $0x8] sm:$0xf]
      %v1227 = vld [vmem:[%s1223 + $0xc] sm:$0xf]
      %v1228 = vld [vmem:[%s1223 + $0x10] sm:$0xf]
      %v1229 = vld [vmem:[%s1223 + $0x14] sm:$0xf]
      %v1230 = vld [vmem:[%s1223 + $0x18] sm:$0xf]
      %v1231 = vld [vmem:[%s1223 + $0x1c] sm:$0xf]
      %v1232 = vld [vmem:[%s1223 + $0x20] sm:$0xf]
      %v1233 = vld [vmem:[%s1223 + $0x24] sm:$0xf]
      %v1234 = vld [vmem:[%s1223 + $0x28] sm:$0xf]
      %v1235 = vld [vmem:[%s1223 + $0x2c] sm:$0xf]
      %v1236 = vld [vmem:[%s1223 + $0x30] sm:$0xf]
      %v1237 = vld [vmem:[%s1223 + $0x34] sm:$0xf]
      %v1238 = vld [vmem:[%s1223 + $0x38] sm:$0xf]
      %v1239 = vld [vmem:[%s1223 + $0x3c] sm:$0xf]
      %v1244 = vunpack.c.l.b16 %v1219
      %v1245 = vunpack.c.l.b16 %v1220
      %v1246 = vunpack.c.l.b16 %v1221
      %v1247 = vunpack.c.l.b16 %v1222
      %v1248 = vpack.c.b16 %v1245, %v1244
      %v1249 = vpack.c.b16 %v1247, %v1246
      %v1268 = vunpack.c.l.b16 %v1224
      %v1269 = vunpack.c.l.b16 %v1225
      %v1270 = vunpack.c.l.b16 %v1226
      %v1271 = vunpack.c.l.b16 %v1227
      %v1272 = vunpack.c.l.b16 %v1228
      %v1273 = vunpack.c.l.b16 %v1229
      %v1274 = vunpack.c.l.b16 %v1230
      %v1275 = vunpack.c.l.b16 %v1231
      %v1276 = vunpack.c.l.b16 %v1232
      %v1277 = vunpack.c.l.b16 %v1233
      %v1278 = vunpack.c.l.b16 %v1234
      %v1279 = vunpack.c.l.b16 %v1235
      %v1280 = vunpack.c.l.b16 %v1236
      %v1281 = vunpack.c.l.b16 %v1237
      %v1282 = vunpack.c.l.b16 %v1238
      %v1283 = vunpack.c.l.b16 %v1239
      %v1284 = vpack.c.b16 %v1269, %v1268
      %v1285 = vpack.c.b16 %v1271, %v1270
      %v1286 = vpack.c.b16 %v1273, %v1272
      %v1287 = vpack.c.b16 %v1275, %v1274
      %v1288 = vpack.c.b16 %v1277, %v1276
      %v1289 = vpack.c.b16 %v1279, %v1278
      %v1290 = vpack.c.b16 %v1281, %v1280
      %v1291 = vpack.c.b16 %v1283, %v1282
      %1300 = vmatprep.subr.bf16.mxu0 0
      %1301 = vmatpush1.bf16.msra.mxu0 %v1291
      %1302 = vmatprep.subr.bf16.mxu0 0
      %1303 = vmatpush1.bf16.msra.mxu0 %v1290
      %1304 = vmatprep.subr.bf16.mxu0 0
      %1305 = vmatpush1.bf16.msra.mxu0 %v1289
      %1306 = vmatprep.subr.bf16.mxu0 0
      %1307 = vmatpush1.bf16.msra.mxu0 %v1288
      %1308 = vmatprep.subr.bf16.mxu0 0
      %1309 = vmatpush1.bf16.msra.mxu0 %v1287
      %1310 = vmatprep.subr.bf16.mxu0 0
      %1311 = vmatpush1.bf16.msra.mxu0 %v1286
      %1312 = vmatprep.subr.bf16.mxu0 0
      %1313 = vmatpush1.bf16.msra.mxu0 %v1285
      %1314 = vmatprep.subr.bf16.mxu0 0
      %1315 = vmatpush1.bf16.msra.mxu0 %v1284
      %1316 = vmatprep.subr.bf16.mxu0 0
      %1317 = vmatpush2.bf16.msra.mxu0 0
      %1318 = vmatprep.subr.bf16.mxu0 0
      %1319 = vmatpush2.bf16.msra.mxu0 0
      %1320 = vmatprep.subr.bf16.mxu0 0
      %1321 = vmatpush2.bf16.msra.mxu0 0
      %1322 = vmatprep.subr.bf16.mxu0 0
      %1323 = vmatpush2.bf16.msra.mxu0 0
      %1324 = vmatprep.subr.bf16.mxu0 0
      %1325 = vmatpush2.bf16.msra.mxu0 0
      %1326 = vmatprep.subr.bf16.mxu0 0
      %1327 = vmatpush2.bf16.msra.mxu0 0
      %1328 = vmatprep.subr.bf16.mxu0 0
      %1329 = vmatpush2.bf16.msra.mxu0 0
      %1330 = vmatprep.subr.bf16.mxu0 0
      %1331 = vmatpush2.bf16.msra.mxu0 0
      %1332 = vmatprep.mubr.bf16.mxu0 0
      %1333 = vmatmul.mubr.bf16.gmra.mxu0 %v1248
      %v1334 = vpop.f32.mrf.mxu0
      %v1335 = vadd.f32 0.0, %v1334
      %v1336 = vpop.f32.mrf.mxu0
      %v1337 = vpop.f32.mrf.mxu0
      %v1338 = vadd.f32 0.0, %v1337
      %v1339 = vpop.f32.mrf.mxu0
      %1340 = vmatprep.mubr.bf16.mxu0 0
      %1341 = vmatmul.mubr.bf16.gmra.mxu0 %v1249
      %v1342 = vpop.f32.mrf.mxu0
      %v1343 = vadd.f32 0.0, %v1342
      %v1344 = vpop.f32.mrf.mxu0
      %v1345 = vpop.f32.mrf.mxu0
      %v1346 = vadd.f32 0.0, %v1345
      %v1347 = vpop.f32.mrf.mxu0
      %1348 = vdwg.mxu0
      %v1349 = vadd.f32 %v1211, %v1335
      %v1350 = vadd.f32 %v1212, %v1338
      %v1351 = vadd.f32 %v1213, %v1343
      %v1352 = vadd.f32 %v1214, %v1346
      %v1353 = vld [vmem:[%s1218] sm:$0xf]
      %v1354 = vld [vmem:[%s1218 + $0x4] sm:$0x1]
      %v1355 = vld [vmem:[%s1218 + $0x8] sm:$0xf]
      %v1356 = vld [vmem:[%s1218 + $0xc] sm:$0x1]
      %v1357 = vld [vmem:[%s1218 + $0x10] sm:$0xf]
      %v1358 = vld [vmem:[%s1218 + $0x14] sm:$0x1]
      %v1359 = vld [vmem:[%s1218 + $0x18] sm:$0xf]
      %v1360 = vld [vmem:[%s1218 + $0x1c] sm:$0x1]
      %v1362 = vshrl.u32 %v1353, 16
      %v1364 = vrot.slane %v1362, 4
      %v1365 = vshll.u32 %v1353, 16
      %v1367 = vrot.slane %v1365, 5
      %v1368 = vor.u32 %v1364, %v1367
      %v1369 = vrot.slane %v1368, 4
      %v1371 = vshll.u32 %v1354, 16
      %v1373 = vrot.slane %v1371, 5
      %v1374 = vsel %vm288, %v1369, %v1373
      %v1376 = vshrl.u32 %v1355, 16
      %v1378 = vrot.slane %v1376, 4
      %v1379 = vshll.u32 %v1355, 16
      %v1381 = vrot.slane %v1379, 5
      %v1382 = vor.u32 %v1378, %v1381
      %v1383 = vrot.slane %v1382, 4
      %v1385 = vshll.u32 %v1356, 16
      %v1387 = vrot.slane %v1385, 5
      %v1388 = vsel %vm288, %v1383, %v1387
      %v1390 = vshrl.u32 %v1357, 16
      %v1392 = vrot.slane %v1390, 4
      %v1393 = vshll.u32 %v1357, 16
      %v1395 = vrot.slane %v1393, 5
      %v1396 = vor.u32 %v1392, %v1395
      %v1397 = vrot.slane %v1396, 4
      %v1399 = vshll.u32 %v1358, 16
      %v1401 = vrot.slane %v1399, 5
      %v1402 = vsel %vm288, %v1397, %v1401
      %v1404 = vshrl.u32 %v1359, 16
      %v1406 = vrot.slane %v1404, 4
      %v1407 = vshll.u32 %v1359, 16
      %v1409 = vrot.slane %v1407, 5
      %v1410 = vor.u32 %v1406, %v1409
      %v1411 = vrot.slane %v1410, 4
      %v1413 = vshll.u32 %v1360, 16
      %v1415 = vrot.slane %v1413, 5
      %v1416 = vsel %vm288, %v1411, %v1415
      %s1417 = scalar_lea.vmem %s1, 448
      %v1418 = vld [vmem:[%s1417] sm:$0xf]
      %v1419 = vld [vmem:[%s1417 + $0x4] sm:$0xf]
      %v1420 = vld [vmem:[%s1417 + $0x8] sm:$0xf]
      %v1421 = vld [vmem:[%s1417 + $0xc] sm:$0xf]
      %v1422 = vld [vmem:[%s1417 + $0x10] sm:$0xf]
      %v1423 = vld [vmem:[%s1417 + $0x14] sm:$0xf]
      %v1424 = vld [vmem:[%s1417 + $0x18] sm:$0xf]
      %v1425 = vld [vmem:[%s1417 + $0x1c] sm:$0xf]
      %v1426 = vld [vmem:[%s1417 + $0x20] sm:$0xf]
      %v1427 = vld [vmem:[%s1417 + $0x24] sm:$0xf]
      %v1428 = vld [vmem:[%s1417 + $0x28] sm:$0xf]
      %v1429 = vld [vmem:[%s1417 + $0x2c] sm:$0xf]
      %v1430 = vld [vmem:[%s1417 + $0x30] sm:$0xf]
      %v1431 = vld [vmem:[%s1417 + $0x34] sm:$0xf]
      %v1432 = vld [vmem:[%s1417 + $0x38] sm:$0xf]
      %v1433 = vld [vmem:[%s1417 + $0x3c] sm:$0xf]
      %v1434 = vunpack.c.l.b16 %v1374
      %v1435 = vunpack.c.l.b16 %v1388
      %v1436 = vunpack.c.l.b16 %v1402
      %v1437 = vunpack.c.l.b16 %v1416
      %v1438 = vpack.c.b16 %v1435, %v1434
      %v1439 = vpack.c.b16 %v1437, %v1436
      %v1458 = vunpack.c.l.b16 %v1418
      %v1459 = vunpack.c.l.b16 %v1419
      %v1460 = vunpack.c.l.b16 %v1420
      %v1461 = vunpack.c.l.b16 %v1421
      %v1462 = vunpack.c.l.b16 %v1422
      %v1463 = vunpack.c.l.b16 %v1423
      %v1464 = vunpack.c.l.b16 %v1424
      %v1465 = vunpack.c.l.b16 %v1425
      %v1466 = vunpack.c.l.b16 %v1426
      %v1467 = vunpack.c.l.b16 %v1427
      %v1468 = vunpack.c.l.b16 %v1428
      %v1469 = vunpack.c.l.b16 %v1429
      %v1470 = vunpack.c.l.b16 %v1430
      %v1471 = vunpack.c.l.b16 %v1431
      %v1472 = vunpack.c.l.b16 %v1432
      %v1473 = vunpack.c.l.b16 %v1433
      %v1474 = vpack.c.b16 %v1459, %v1458
      %v1475 = vpack.c.b16 %v1461, %v1460
      %v1476 = vpack.c.b16 %v1463, %v1462
      %v1477 = vpack.c.b16 %v1465, %v1464
      %v1478 = vpack.c.b16 %v1467, %v1466
      %v1479 = vpack.c.b16 %v1469, %v1468
      %v1480 = vpack.c.b16 %v1471, %v1470
      %v1481 = vpack.c.b16 %v1473, %v1472
      %1490 = vmatprep.subr.bf16.mxu0 0
      %1491 = vmatpush1.bf16.msra.mxu0 %v1481
      %1492 = vmatprep.subr.bf16.mxu0 0
      %1493 = vmatpush1.bf16.msra.mxu0 %v1480
      %1494 = vmatprep.subr.bf16.mxu0 0
      %1495 = vmatpush1.bf16.msra.mxu0 %v1479
      %1496 = vmatprep.subr.bf16.mxu0 0
      %1497 = vmatpush1.bf16.msra.mxu0 %v1478
      %1498 = vmatprep.subr.bf16.mxu0 0
      %1499 = vmatpush1.bf16.msra.mxu0 %v1477
      %1500 = vmatprep.subr.bf16.mxu0 0
      %1501 = vmatpush1.bf16.msra.mxu0 %v1476
      %1502 = vmatprep.subr.bf16.mxu0 0
      %1503 = vmatpush1.bf16.msra.mxu0 %v1475
      %1504 = vmatprep.subr.bf16.mxu0 0
      %1505 = vmatpush1.bf16.msra.mxu0 %v1474
      %1506 = vmatprep.subr.bf16.mxu0 0
      %1507 = vmatpush2.bf16.msra.mxu0 0
      %1508 = vmatprep.subr.bf16.mxu0 0
      %1509 = vmatpush2.bf16.msra.mxu0 0
      %1510 = vmatprep.subr.bf16.mxu0 0
      %1511 = vmatpush2.bf16.msra.mxu0 0
      %1512 = vmatprep.subr.bf16.mxu0 0
      %1513 = vmatpush2.bf16.msra.mxu0 0
      %1514 = vmatprep.subr.bf16.mxu0 0
      %1515 = vmatpush2.bf16.msra.mxu0 0
      %1516 = vmatprep.subr.bf16.mxu0 0
      %1517 = vmatpush2.bf16.msra.mxu0 0
      %1518 = vmatprep.subr.bf16.mxu0 0
      %1519 = vmatpush2.bf16.msra.mxu0 0
      %1520 = vmatprep.subr.bf16.mxu0 0
      %1521 = vmatpush2.bf16.msra.mxu0 0
      %1522 = vmatprep.mubr.bf16.mxu0 0
      %1523 = vmatmul.mubr.bf16.gmra.mxu0 %v1438
      %v1524 = vpop.f32.mrf.mxu0
      %v1525 = vadd.f32 0.0, %v1524
      %v1526 = vpop.f32.mrf.mxu0
      %v1527 = vpop.f32.mrf.mxu0
      %v1528 = vadd.f32 0.0, %v1527
      %v1529 = vpop.f32.mrf.mxu0
      %1530 = vmatprep.mubr.bf16.mxu0 0
      %1531 = vmatmul.mubr.bf16.gmra.mxu0 %v1439
      %v1532 = vpop.f32.mrf.mxu0
      %v1533 = vadd.f32 0.0, %v1532
      %v1534 = vpop.f32.mrf.mxu0
      %v1535 = vpop.f32.mrf.mxu0
      %v1536 = vadd.f32 0.0, %v1535
      %v1537 = vpop.f32.mrf.mxu0
      %1538 = vdwg.mxu0
      %v1539 = vadd.f32 %v1349, %v1525
      %v1540 = vadd.f32 %v1350, %v1528
      %v1541 = vadd.f32 %v1351, %v1533
      %v1542 = vadd.f32 %v1352, %v1536
      %v1543 = vld [vmem:[%s1218] sm:$0xe]
      %v1544 = vld [vmem:[%s1218 + $0x8] sm:$0xe]
      %v1545 = vld [vmem:[%s1218 + $0x10] sm:$0xe]
      %v1546 = vld [vmem:[%s1218 + $0x18] sm:$0xe]
      %v1555 = vrot.slane %v1543, 5
      %v1556 = vrot.slane %v1555, 4
      %v1557 = vrot.slane %v1354, 5
      %v1558 = vsel %vm590, %v1556, %v1557
      %v1559 = vrot.slane %v1544, 5
      %v1560 = vrot.slane %v1559, 4
      %v1561 = vrot.slane %v1356, 5
      %v1562 = vsel %vm590, %v1560, %v1561
      %v1563 = vrot.slane %v1545, 5
      %v1564 = vrot.slane %v1563, 4
      %v1565 = vrot.slane %v1358, 5
      %v1566 = vsel %vm590, %v1564, %v1565
      %v1567 = vrot.slane %v1546, 5
      %v1568 = vrot.slane %v1567, 4
      %v1569 = vrot.slane %v1360, 5
      %v1570 = vsel %vm590, %v1568, %v1569
      %s1571 = scalar_lea.vmem %s1, 512
      %v1572 = vld [vmem:[%s1571] sm:$0xf]
      %v1573 = vld [vmem:[%s1571 + $0x4] sm:$0xf]
      %v1574 = vld [vmem:[%s1571 + $0x8] sm:$0xf]
      %v1575 = vld [vmem:[%s1571 + $0xc] sm:$0xf]
      %v1576 = vld [vmem:[%s1571 + $0x10] sm:$0xf]
      %v1577 = vld [vmem:[%s1571 + $0x14] sm:$0xf]
      %v1578 = vld [vmem:[%s1571 + $0x18] sm:$0xf]
      %v1579 = vld [vmem:[%s1571 + $0x1c] sm:$0xf]
      %v1580 = vld [vmem:[%s1571 + $0x20] sm:$0xf]
      %v1581 = vld [vmem:[%s1571 + $0x24] sm:$0xf]
      %v1582 = vld [vmem:[%s1571 + $0x28] sm:$0xf]
      %v1583 = vld [vmem:[%s1571 + $0x2c] sm:$0xf]
      %v1584 = vld [vmem:[%s1571 + $0x30] sm:$0xf]
      %v1585 = vld [vmem:[%s1571 + $0x34] sm:$0xf]
      %v1586 = vld [vmem:[%s1571 + $0x38] sm:$0xf]
      %v1587 = vld [vmem:[%s1571 + $0x3c] sm:$0xf]
      %v1588 = vunpack.c.l.b16 %v1558
      %v1589 = vunpack.c.l.b16 %v1562
      %v1590 = vunpack.c.l.b16 %v1566
      %v1591 = vunpack.c.l.b16 %v1570
      %v1592 = vpack.c.b16 %v1589, %v1588
      %v1593 = vpack.c.b16 %v1591, %v1590
      %v1612 = vunpack.c.l.b16 %v1572
      %v1613 = vunpack.c.l.b16 %v1573
      %v1614 = vunpack.c.l.b16 %v1574
      %v1615 = vunpack.c.l.b16 %v1575
      %v1616 = vunpack.c.l.b16 %v1576
      %v1617 = vunpack.c.l.b16 %v1577
      %v1618 = vunpack.c.l.b16 %v1578
      %v1619 = vunpack.c.l.b16 %v1579
      %v1620 = vunpack.c.l.b16 %v1580
      %v1621 = vunpack.c.l.b16 %v1581
      %v1622 = vunpack.c.l.b16 %v1582
      %v1623 = vunpack.c.l.b16 %v1583
      %v1624 = vunpack.c.l.b16 %v1584
      %v1625 = vunpack.c.l.b16 %v1585
      %v1626 = vunpack.c.l.b16 %v1586
      %v1627 = vunpack.c.l.b16 %v1587
      %v1628 = vpack.c.b16 %v1613, %v1612
      %v1629 = vpack.c.b16 %v1615, %v1614
      %v1630 = vpack.c.b16 %v1617, %v1616
      %v1631 = vpack.c.b16 %v1619, %v1618
      %v1632 = vpack.c.b16 %v1621, %v1620
      %v1633 = vpack.c.b16 %v1623, %v1622
      %v1634 = vpack.c.b16 %v1625, %v1624
      %v1635 = vpack.c.b16 %v1627, %v1626
      %1644 = vmatprep.subr.bf16.mxu0 0
      %1645 = vmatpush1.bf16.msra.mxu0 %v1635
      %1646 = vmatprep.subr.bf16.mxu0 0
      %1647 = vmatpush1.bf16.msra.mxu0 %v1634
      %1648 = vmatprep.subr.bf16.mxu0 0
      %1649 = vmatpush1.bf16.msra.mxu0 %v1633
      %1650 = vmatprep.subr.bf16.mxu0 0
      %1651 = vmatpush1.bf16.msra.mxu0 %v1632
      %1652 = vmatprep.subr.bf16.mxu0 0
      %1653 = vmatpush1.bf16.msra.mxu0 %v1631
      %1654 = vmatprep.subr.bf16.mxu0 0
      %1655 = vmatpush1.bf16.msra.mxu0 %v1630
      %1656 = vmatprep.subr.bf16.mxu0 0
      %1657 = vmatpush1.bf16.msra.mxu0 %v1629
      %1658 = vmatprep.subr.bf16.mxu0 0
      %1659 = vmatpush1.bf16.msra.mxu0 %v1628
      %1660 = vmatprep.subr.bf16.mxu0 0
      %1661 = vmatpush2.bf16.msra.mxu0 0
      %1662 = vmatprep.subr.bf16.mxu0 0
      %1663 = vmatpush2.bf16.msra.mxu0 0
      %1664 = vmatprep.subr.bf16.mxu0 0
      %1665 = vmatpush2.bf16.msra.mxu0 0
      %1666 = vmatprep.subr.bf16.mxu0 0
      %1667 = vmatpush2.bf16.msra.mxu0 0
      %1668 = vmatprep.subr.bf16.mxu0 0
      %1669 = vmatpush2.bf16.msra.mxu0 0
      %1670 = vmatprep.subr.bf16.mxu0 0
      %1671 = vmatpush2.bf16.msra.mxu0 0
      %1672 = vmatprep.subr.bf16.mxu0 0
      %1673 = vmatpush2.bf16.msra.mxu0 0
      %1674 = vmatprep.subr.bf16.mxu0 0
      %1675 = vmatpush2.bf16.msra.mxu0 0
      %1676 = vmatprep.mubr.bf16.mxu0 0
      %1677 = vmatmul.mubr.bf16.gmra.mxu0 %v1592
      %v1678 = vpop.f32.mrf.mxu0
      %v1679 = vadd.f32 0.0, %v1678
      %v1680 = vpop.f32.mrf.mxu0
      %v1681 = vpop.f32.mrf.mxu0
      %v1682 = vadd.f32 0.0, %v1681
      %v1683 = vpop.f32.mrf.mxu0
      %1684 = vmatprep.mubr.bf16.mxu0 0
      %1685 = vmatmul.mubr.bf16.gmra.mxu0 %v1593
      %v1686 = vpop.f32.mrf.mxu0
      %v1687 = vadd.f32 0.0, %v1686
      %v1688 = vpop.f32.mrf.mxu0
      %v1689 = vpop.f32.mrf.mxu0
      %v1690 = vadd.f32 0.0, %v1689
      %v1691 = vpop.f32.mrf.mxu0
      %1692 = vdwg.mxu0
      %v1693 = vadd.f32 %v1539, %v1679
      %v1694 = vadd.f32 %v1540, %v1682
      %v1695 = vadd.f32 %v1541, %v1687
      %v1696 = vadd.f32 %v1542, %v1690
      %v1697 = vld [vmem:[%s245] sm:$0xf]
      %v1698 = vld [vmem:[%s245 + $0x4] sm:$0xf]
      %v1699 = vld [vmem:[%s245 + $0x8] sm:$0xf]
      %v1700 = vld [vmem:[%s245 + $0xc] sm:$0xf]
      %v1701 = vld [vmem:[%s3] sm:$0xf]
      %v1702 = vld [vmem:[%s3 + $0x4] sm:$0xf]
      %v1703 = vld [vmem:[%s3 + $0x8] sm:$0xf]
      %v1704 = vld [vmem:[%s3 + $0xc] sm:$0xf]
      %v1705 = vld [vmem:[%s3 + $0x10] sm:$0xf]
      %v1706 = vld [vmem:[%s3 + $0x14] sm:$0xf]
      %v1707 = vld [vmem:[%s3 + $0x18] sm:$0xf]
      %v1708 = vld [vmem:[%s3 + $0x1c] sm:$0xf]
      %v1709 = vld [vmem:[%s3 + $0x20] sm:$0xf]
      %v1710 = vld [vmem:[%s3 + $0x24] sm:$0xf]
      %v1711 = vld [vmem:[%s3 + $0x28] sm:$0xf]
      %v1712 = vld [vmem:[%s3 + $0x2c] sm:$0xf]
      %v1713 = vld [vmem:[%s3 + $0x30] sm:$0xf]
      %v1714 = vld [vmem:[%s3 + $0x34] sm:$0xf]
      %v1715 = vld [vmem:[%s3 + $0x38] sm:$0xf]
      %v1716 = vld [vmem:[%s3 + $0x3c] sm:$0xf]
      %v1721 = vunpack.c.l.b16 %v1697
      %v1722 = vunpack.c.l.b16 %v1698
      %v1723 = vunpack.c.l.b16 %v1699
      %v1724 = vunpack.c.l.b16 %v1700
      %v1725 = vpack.c.b16 %v1722, %v1721
      %v1726 = vpack.c.b16 %v1724, %v1723
      %v1745 = vunpack.c.l.b16 %v1701
      %v1746 = vunpack.c.l.b16 %v1702
      %v1747 = vunpack.c.l.b16 %v1703
      %v1748 = vunpack.c.l.b16 %v1704
      %v1749 = vunpack.c.l.b16 %v1705
      %v1750 = vunpack.c.l.b16 %v1706
      %v1751 = vunpack.c.l.b16 %v1707
      %v1752 = vunpack.c.l.b16 %v1708
      %v1753 = vunpack.c.l.b16 %v1709
      %v1754 = vunpack.c.l.b16 %v1710
      %v1755 = vunpack.c.l.b16 %v1711
      %v1756 = vunpack.c.l.b16 %v1712
      %v1757 = vunpack.c.l.b16 %v1713
      %v1758 = vunpack.c.l.b16 %v1714
      %v1759 = vunpack.c.l.b16 %v1715
      %v1760 = vunpack.c.l.b16 %v1716
      %v1761 = vpack.c.b16 %v1746, %v1745
      %v1762 = vpack.c.b16 %v1748, %v1747
      %v1763 = vpack.c.b16 %v1750, %v1749
      %v1764 = vpack.c.b16 %v1752, %v1751
      %v1765 = vpack.c.b16 %v1754, %v1753
      %v1766 = vpack.c.b16 %v1756, %v1755
      %v1767 = vpack.c.b16 %v1758, %v1757
      %v1768 = vpack.c.b16 %v1760, %v1759
      %1777 = vmatprep.subr.bf16.mxu0 0
      %1778 = vmatpush1.bf16.msra.mxu0 %v1768
      %1779 = vmatprep.subr.bf16.mxu0 0
      %1780 = vmatpush1.bf16.msra.mxu0 %v1767
      %1781 = vmatprep.subr.bf16.mxu0 0
      %1782 = vmatpush1.bf16.msra.mxu0 %v1766
      %1783 = vmatprep.subr.bf16.mxu0 0
      %1784 = vmatpush1.bf16.msra.mxu0 %v1765
      %1785 = vmatprep.subr.bf16.mxu0 0
      %1786 = vmatpush1.bf16.msra.mxu0 %v1764
      %1787 = vmatprep.subr.bf16.mxu0 0
      %1788 = vmatpush1.bf16.msra.mxu0 %v1763
      %1789 = vmatprep.subr.bf16.mxu0 0
      %1790 = vmatpush1.bf16.msra.mxu0 %v1762
      %1791 = vmatprep.subr.bf16.mxu0 0
      %1792 = vmatpush1.bf16.msra.mxu0 %v1761
      %1793 = vmatprep.subr.bf16.mxu0 0
      %1794 = vmatpush2.bf16.msra.mxu0 0
      %1795 = vmatprep.subr.bf16.mxu0 0
      %1796 = vmatpush2.bf16.msra.mxu0 0
      %1797 = vmatprep.subr.bf16.mxu0 0
      %1798 = vmatpush2.bf16.msra.mxu0 0
      %1799 = vmatprep.subr.bf16.mxu0 0
      %1800 = vmatpush2.bf16.msra.mxu0 0
      %1801 = vmatprep.subr.bf16.mxu0 0
      %1802 = vmatpush2.bf16.msra.mxu0 0
      %1803 = vmatprep.subr.bf16.mxu0 0
      %1804 = vmatpush2.bf16.msra.mxu0 0
      %1805 = vmatprep.subr.bf16.mxu0 0
      %1806 = vmatpush2.bf16.msra.mxu0 0
      %1807 = vmatprep.subr.bf16.mxu0 0
      %1808 = vmatpush2.bf16.msra.mxu0 0
      %1809 = vmatprep.mubr.bf16.mxu0 0
      %1810 = vmatmul.mubr.bf16.gmra.mxu0 %v1725
      %v1811 = vpop.f32.mrf.mxu0
      %v1812 = vadd.f32 0.0, %v1811
      %v1813 = vpop.f32.mrf.mxu0
      %v1814 = vpop.f32.mrf.mxu0
      %v1815 = vadd.f32 0.0, %v1814
      %v1816 = vpop.f32.mrf.mxu0
      %1817 = vmatprep.mubr.bf16.mxu0 0
      %1818 = vmatmul.mubr.bf16.gmra.mxu0 %v1726
      %v1819 = vpop.f32.mrf.mxu0
      %v1820 = vadd.f32 0.0, %v1819
      %v1821 = vpop.f32.mrf.mxu0
      %v1822 = vpop.f32.mrf.mxu0
      %v1823 = vadd.f32 0.0, %v1822
      %v1824 = vpop.f32.mrf.mxu0
      %1825 = vdwg.mxu0
      %v1826 = vrcp.pop 0.85714287
      %v1827 = vmul.f32 %v1693, %v1826
      %v1828 = vmul.f32 %v1694, %v1826
      %v1829 = vmul.f32 %v1695, %v1826
      %v1830 = vmul.f32 %v1696, %v1826
      %v1831 = vround.ne.pseudo %v1827
      %v1832 = vround.ne.pseudo %v1828
      %v1833 = vround.ne.pseudo %v1829
      %v1834 = vround.ne.pseudo %v1830
      %v1835 = vmax.f32 %v1831, -8.0
      %v1836 = vmax.f32 %v1832, -8.0
      %v1837 = vmax.f32 %v1833, -8.0
      %v1838 = vmax.f32 %v1834, -8.0
      %v1839 = vmin.f32 %v1835, 7.0
      %v1840 = vmin.f32 %v1836, 7.0
      %v1841 = vmin.f32 %v1837, 7.0
      %v1842 = vmin.f32 %v1838, 7.0
      %v1843 = vmul.f32 %v1839, 0.85714287
      %v1844 = vmul.f32 %v1840, 0.85714287
      %v1845 = vmul.f32 %v1841, 0.85714287
      %v1846 = vmul.f32 %v1842, 0.85714287
      %v1847 = vmul.f32 %v1812, %v1826
      %v1848 = vmul.f32 %v1815, %v1826
      %v1849 = vmul.f32 %v1820, %v1826
      %v1850 = vmul.f32 %v1823, %v1826
      %v1851 = vround.ne.pseudo %v1847
      %v1852 = vround.ne.pseudo %v1848
      %v1853 = vround.ne.pseudo %v1849
      %v1854 = vround.ne.pseudo %v1850
      %v1855 = vmax.f32 %v1851, -8.0
      %v1856 = vmax.f32 %v1852, -8.0
      %v1857 = vmax.f32 %v1853, -8.0
      %v1858 = vmax.f32 %v1854, -8.0
      %v1859 = vmin.f32 %v1855, 7.0
      %v1860 = vmin.f32 %v1856, 7.0
      %v1861 = vmin.f32 %v1857, 7.0
      %v1862 = vmin.f32 %v1858, 7.0
      %v1863 = vmul.f32 %v1859, 0.85714287
      %v1864 = vmul.f32 %v1860, 0.85714287
      %v1865 = vmul.f32 %v1861, 0.85714287
      %v1866 = vmul.f32 %v1862, 0.85714287
      %v1867 = vadd.f32 %v1843, %v1863
      %v1868 = vadd.f32 %v1844, %v1864
      %v1869 = vadd.f32 %v1845, %v1865
      %v1870 = vadd.f32 %v1846, %v1866
      %v1871 = vmax.f32 %v1867, 0.0
      %v1872 = vmax.f32 %v1868, 0.0
      %v1873 = vmax.f32 %v1869, 0.0
      %v1874 = vmax.f32 %v1870, 0.0
      %v1875 = vrcp.pop 0.4
      %v1876 = vmul.f32 %v1871, %v1875
      %v1877 = vmul.f32 %v1872, %v1875
      %v1878 = vmul.f32 %v1873, %v1875
      %v1879 = vmul.f32 %v1874, %v1875
      %v1880 = vround.ne.pseudo %v1876
      %v1881 = vround.ne.pseudo %v1877
      %v1882 = vround.ne.pseudo %v1878
      %v1883 = vround.ne.pseudo %v1879
      %v1884 = vmax.f32 %v1880, 0.0
      %v1885 = vmax.f32 %v1881, 0.0
      %v1886 = vmax.f32 %v1882, 0.0
      %v1887 = vmax.f32 %v1883, 0.0
      %v1888 = vmin.f32 %v1884, 15.0
      %v1889 = vmin.f32 %v1885, 15.0
      %v1890 = vmin.f32 %v1886, 15.0
      %v1891 = vmin.f32 %v1887, 15.0
      %v1892 = vmul.f32 %v1888, 0.4
      %v1893 = vmul.f32 %v1889, 0.4
      %v1894 = vmul.f32 %v1890, 0.4
      %v1895 = vmul.f32 %v1891, 0.4
      %1896 = vst [vmem:[%s255] sm:$0xff] %v1892
      %1897 = vst [vmem:[%s255 + $0x8] sm:$0xff] %v1893
      %1898 = vst [vmem:[%s255 + $0x10] sm:$0xff] %v1894
      %1899 = vst [vmem:[%s255 + $0x18] sm:$0xff] %v1895
      %s1900 = smul.u32 4, %s20
      %p1901 = scmp.lt.s32.totalorder %s19, 1
      %s1902 = scalar_select %p1901, %s19, 1
      %p1903 = scmp.lt.s32.totalorder %s1900, 7
      %s1904 = scalar_select %p1903, %s1900, 7
      %s1905 = smul.addr %s1902, 8
      %s1906 = sadd.s32 %s1904, %s1905
      %s1907 = smul.addr %s1906, 8
      %s1908 = scalar_lea.vmem %s4, %s1907
      // Predicated region
      $region37: #{a_call__.3} parent=35 // pred_check
        %p1909 = pneg %p143
      $region38: #{a_call__.3} parent=35 // pred_check_branch
        %1911 = sbr.rel (%p1909) target = $region40
      $region39: #{a_call__.3} parent=35 // pred_region
        %s1912 = smul.u32 4, %s20
      $region40: #{a_call__.3} parent=35 // pred_fallthru
        _
    $region36: #{a_call__.3} parent=5 // pred_fallthru
      _
    %p1913 = scmp.le.s32.totalorder 2, %s10
    // Predicated region
    $region41: #{a_call__.3} parent=5 // pred_check
      %p1914 = pneg %p1913
    $region42: #{a_call__.3} parent=5 // pred_check_branch
      %1916 = sbr.rel (%p1914) target = $region44
    $region43: #{a_call__.3} parent=5 // pred_region
      %s1917 = ssub.s32 %s10, 2
      // Predicated region
      $region45: #{a_call__.3} parent=43 // pred_check
        %p1918 = pneg %p149
      $region46: #{a_call__.3} parent=43 // pred_check_branch
        %1920 = sbr.rel (%p1918) target = $region48
      $region47: #{a_call__.3} parent=43 // pred_region
        %s1921 = smul.u32 4, %s22
        %p1922 = scmp.lt.s32.totalorder %s21, 1
        %s1923 = scalar_select %p1922, %s21, 1
        %p1924 = scmp.lt.s32.totalorder %s1921, 7
        %s1925 = scalar_select %p1924, %s1921, 7
        %s1926 = smul.addr %s1923, 8
        %s1927 = sadd.s32 %s1925, %s1926
        %s1928 = smul.addr %s1927, 8
        %s1929 = scalar_lea.vmem %s4, %s1928
      $region48: #{a_call__.3} parent=43 // pred_fallthru
        _
    $region44: #{a_call__.3} parent=5 // pred_fallthru
      _
  $region6: #{a_call__.3} parent=0 // loop_footer
    %s14 = sadd.s32 1, %s10
  $region7: #{a_call__.3} parent=0 // loop_footer_branch
    %9 = sbr.rel target = $region3
  $region8: #{a_call__.3} parent=0 // loop_exit
    _

</llo_original>
